<compile_context>
chip_gen: v7x
topology: tpu7x:2x2x1
jax: 0.10.0
libtpu: 0.0.40
codegen_flags: <defaults>
</compile_context>

<pallas_src>
from functools import partial

import jax
import jax.numpy as jnp
from jax.experimental import pallas as pl
from jax.experimental.pallas import tpu as pltpu


def _linear_kernel(x_ref, w_ref, b_ref, o_ref):
    # x_ref: (B, 768) f32, w_ref: (768, block_c) K-major (bf16 or f32),
    # b_ref: (1, block_c) f32.  Plain MXU matmul with f32 accumulation and a
    # fused bias add on the VPU (rides idle slots under the weight DMA).
    x = x_ref[...].astype(w_ref.dtype)      # cheap: only B*K elements
    acc = jnp.dot(x, w_ref[...], preferred_element_type=jnp.float32)
    o_ref[...] = (acc + b_ref[...]).astype(o_ref.dtype)


def _round_up(n, m):
    return (n + m - 1) // m * m


def prepare_params(weight, bias, param_dtype=jnp.bfloat16, lane=128):
    """One-time (init-time) parameter prep.

    Takes the PyTorch nn.Linear weight (num_classes, 768) and bias
    (num_classes,) and returns:
      * weight stored K-major as (768, C_pad), zero-padded on the class dim to
        a multiple of `lane` so weight loads / output stores are lane-dense,
        cast to `param_dtype` (bf16 by default: halves HBM weight traffic).
      * bias as (1, C_pad) float32 (epilogue stays f32).
    The transpose/pad/cast happen once outside the hot path.
    """
    c, k = weight.shape
    c_pad = _round_up(c, lane)
    w = jnp.zeros((k, c_pad), param_dtype).at[:, :c].set(
        weight.T.astype(param_dtype))
    b = jnp.zeros((1, c_pad), jnp.float32).at[0, :c].set(
        bias.astype(jnp.float32))
    return w, b


def pick_block_c(c_pad):
    """Class-dim tile: split across the 2 TensorCores on v7x, single block elsewhere."""
    assert c_pad % 128 == 0, "class dim must be padded to a multiple of 128"
    try:
        kind = jax.devices()[0].device_kind.lower()
    except Exception:
        kind = ""
    if "v7" in kind and c_pad % 256 == 0:
        block_c = c_pad // 2          # 2 "parallel" steps -> one per TensorCore
    else:
        block_c = c_pad               # single block: no extra grid-step overhead
    assert c_pad % block_c == 0 and block_c % 128 == 0
    return block_c


@partial(jax.jit, static_argnames=("num_classes", "block_c"))
def vit_b16_tail(x, w_padded, b_padded, *, num_classes, block_c):
    """Forward pass of ViTB16Tail: x @ W.T + b.

    Args:
      x:        (B, 768) float32 activations.
      w_padded: (768, C_pad) weight from prepare_params (K-major, padded,
                bf16 by default).
      b_padded: (1, C_pad) float32 bias from prepare_params.
      num_classes: logical number of classes (output is sliced back to this).
      block_c:  class-dim tile (multiple of 128 dividing C_pad).
    Returns:
      (B, num_classes) float32 logits.
    """
    B, K = x.shape
    K_w, C_pad = w_padded.shape
    assert K_w == K
    assert C_pad % block_c == 0
    grid = (C_pad // block_c,)

    itemsize_w = jnp.dtype(w_padded.dtype).itemsize
    itemsize_x = jnp.dtype(x.dtype).itemsize
    cost = pl.CostEstimate(
        flops=2 * B * K * C_pad,
        transcendentals=0,
        bytes_accessed=(K * C_pad * itemsize_w        # weight stream (dominant)
                        + B * K * itemsize_x          # activations
                        + B * C_pad * itemsize_x      # output
                        + C_pad * 4))                 # bias

    out_padded = pl.pallas_call(
        _linear_kernel,
        out_shape=jax.ShapeDtypeStruct((B, C_pad), x.dtype),
        grid=grid,
        in_specs=[
            pl.BlockSpec((B, K), lambda j: (0, 0)),        # x resident across steps
            pl.BlockSpec((K, block_c), lambda j: (0, j)),  # stream K-major weight cols
            pl.BlockSpec((1, block_c), lambda j: (0, j)),  # matching bias slice
        ],
        out_specs=pl.BlockSpec((B, block_c), lambda j: (0, j)),
        compiler_params=pltpu.CompilerParams(
            dimension_semantics=("parallel",)),            # v7x: 2 TCs split the C axis
        cost_estimate=cost,
    )(x, w_padded, b_padded)

    # Module semantics: (B, num_classes).  (For fused consumers, returning the
    # padded slab and indexing downstream avoids this tiny extra op.)
    return out_padded[:, :num_classes]


if __name__ == "__main__":
    num_classes = 1000
    in_features = 768
    batch = 2

    key = jax.random.PRNGKey(0)
    kx, kw, kb = jax.random.split(key, 3)

    # Deterministic synthetic parameters (PyTorch nn.Linear shapes / init range).
    bound = 1.0 / (in_features ** 0.5)
    weight = jax.random.uniform(
        kw, (num_classes, in_features), jnp.float32, minval=-bound, maxval=bound)
    bias = jax.random.uniform(
        kb, (num_classes,), jnp.float32, minval=-bound, maxval=bound)
    x = jax.random.normal(kx, (batch, in_features), jnp.float32)

    ref = x @ weight.T + bias

    # --- default hot path: bf16 weight stream, f32 accumulate + f32 bias ---
    w_bf16, b_bf16 = prepare_params(weight, bias)            # bf16 default
    block_c = pick_block_c(w_bf16.shape[1])
    out = vit_b16_tail(x, w_bf16, b_bf16, num_classes=num_classes, block_c=block_c)
    out = jax.block_until_ready(out)
    assert out.shape == (batch, num_classes)
    assert jnp.allclose(out, ref, atol=5e-2, rtol=5e-2)

    # --- f32 fallback path (exact nn.Linear semantics) ---
    w_f32, b_f32 = prepare_params(weight, bias, param_dtype=jnp.float32)
    out_f32 = vit_b16_tail(x, w_f32, b_f32, num_classes=num_classes, block_c=block_c)
    out_f32 = jax.block_until_ready(out_f32)
    assert out_f32.shape == (batch, num_classes)
    assert jnp.allclose(out_f32, ref, atol=1e-4, rtol=1e-4)

    print("KERNEL_OK")
</pallas_src>

<mosaic_0001>
module attributes {stable_mosaic.version = 11 : i64} {
  func.func @_linear_kernel(%arg0: i32, %arg1: memref<2x768xf32, #tpu.memory_space<vmem>>, %arg2: memref<768x1024xbf16, #tpu.memory_space<vmem>>, %arg3: memref<1x1024xf32, #tpu.memory_space<vmem>>, %arg4: memref<2x1024xf32, #tpu.memory_space<vmem>>) attributes {dimension_semantics = [#tpu.dimension_semantics<parallel>], iteration_bounds = array<i64: 1>, scalar_prefetch = 0 : i64, scratch_operands = 0 : i64, tpu.core_type = #tpu.core_type<tc>, window_params = [{pipeline_mode = #tpu.pipeline_mode<synchronous>, transform_indices = @transform_0, window_bounds = array<i64: 2, 768>}, {transform_indices = @transform_1, window_bounds = array<i64: 768, 1024>}, {transform_indices = @transform_2, window_bounds = array<i64: 1, 1024>}, {transform_indices = @transform_3, window_bounds = array<i64: 2, 1024>}]} {
    %c0 = arith.constant 0 : index
    %c0_0 = arith.constant 0 : index
    %0 = vector.load %arg1[%c0, %c0_0] : memref<2x768xf32, #tpu.memory_space<vmem>>, vector<2x768xf32>
    %1 = arith.truncf %0 : vector<2x768xf32> to vector<2x768xbf16>
    %c0_1 = arith.constant 0 : index
    %c0_2 = arith.constant 0 : index
    %2 = vector.load %arg2[%c0_1, %c0_2] : memref<768x1024xbf16, #tpu.memory_space<vmem>>, vector<768x1024xbf16>
    %cst = arith.constant dense<0.000000e+00> : vector<2x1024xf32>
    %3 = tpu.matmul %1, %2, %cst {dimension_numbers = #tpu.dot_dimension_numbers<[1], [0], [0], [1], [0, 0, 1, 1], [], []>} : vector<2x768xbf16>, vector<768x1024xbf16>, vector<2x1024xf32> -> vector<2x1024xf32>
    %c0_3 = arith.constant 0 : index
    %c0_4 = arith.constant 0 : index
    %4 = vector.load %arg3[%c0_3, %c0_4] : memref<1x1024xf32, #tpu.memory_space<vmem>>, vector<1x1024xf32>
    %5 = vector.broadcast %4 : vector<1x1024xf32> to vector<2x1024xf32>
    %6 = arith.addf %3, %5 : vector<2x1024xf32>
    %c0_5 = arith.constant 0 : index
    %c0_6 = arith.constant 0 : index
    %7 = vector.load %arg4[%c0_5, %c0_6] : memref<2x1024xf32, #tpu.memory_space<vmem>>, vector<2x1024xf32>
    tpu.vector_store %arg4[%c0_5, %c0_6], %6 {strides = array<i32>} : memref<2x1024xf32, #tpu.memory_space<vmem>>, vector<2x1024xf32>,
    return
  }
  func.func @transform_0(%arg0: i32) -> (i32, i32) {
    %c0_i32 = arith.constant 0 : i32
    %c0_i32_0 = arith.constant 0 : i32
    %c0_i32_1 = arith.constant 0 : i32
    return %c0_i32, %c0_i32_0 : i32, i32
  }
  func.func @transform_1(%arg0: i32) -> (i32, i32) {
    %c0_i32 = arith.constant 0 : i32
    %c0_i32_0 = arith.constant 0 : i32
    return %c0_i32, %arg0 : i32, i32
  }
  func.func @transform_2(%arg0: i32) -> (i32, i32) {
    %c0_i32 = arith.constant 0 : i32
    %c0_i32_0 = arith.constant 0 : i32
    return %c0_i32, %arg0 : i32, i32
  }
  func.func @transform_3(%arg0: i32) -> (i32, i32) {
    %c0_i32 = arith.constant 0 : i32
    %c0_i32_0 = arith.constant 0 : i32
    return %c0_i32, %arg0 : i32, i32
  }
}

</mosaic_0001>

<llo_original>
// kernel: vit_b16_tail.1
$region0: #{vit_b16_tail.1}
  #allocation0 [shape = 'u32[]', space=smem, size = 0x4, offset = 0x4, fixed_abs, tag = 'smem constant byte address 0x4 - core index']
  #allocation1 [shape = 'u32[144,128]{1,0:T(1,128)}', space=vmem, size = 0x12000, scoped, tag = 'internal scratch']
  %s0 = inlined_call_operand.hbm [shape: f32[2,768], index: 0, kind: input, shape index: {}]
  %s1 = inlined_call_operand.hbm [shape: bf16[768,1024], index: 1, kind: input, shape index: {}]
  %s2 = inlined_call_operand.hbm [shape: f32[1,1024], index: 2, kind: input, shape index: {}]
  %s3 = inlined_call_operand.hbm [shape: f32[2,1024], index: 3, kind: output, shape index: {}]
  %s4 = sld [smem:[#allocation0]]
  $region34: #{vit_b16_tail.1} parent=0
    _
  %s6 = ssub.s32 1, %s4
  %s7 = scalar_select 0, %s6, %s4
  $region1: #{vit_b16_tail.1} parent=0
    #allocation2 [shape = 'u8[6144]{0}', space=vmem, size = 0x1800, scoped, tag = 'input window, operand 0, single buffered']
    #allocation3 [shape = 's32[1]{0}', space=sflag, size = 0x4, scoped, tag = 'scoped memory for vit_b16_tail.1']
    #allocation4 [shape = 's32[1]{0}', space=sflag, size = 0x4, scoped, tag = 'scoped memory for vit_b16_tail.1']
    #allocation5 [shape = 'u8[1572864]{0}', space=vmem, size = 0x180000, scoped, tag = 'input window, operand 1, single buffered']
    #allocation6 [shape = 's32[1]{0}', space=sflag, size = 0x4, scoped, tag = 'scoped memory for vit_b16_tail.1']
    #allocation7 [shape = 'u8[4096]{0}', space=vmem, size = 0x1000, scoped, tag = 'input window, operand 2, single buffered']
    #allocation8 [shape = 'u8[8192]{0}', space=vmem, size = 0x2000, scoped, tag = 'output window, operand 0, single buffered']
    %8 = vsyncpa [#allocation3], 0
    %9 = vsyncpa [#allocation6], 0
    %10 = vsyncpa [#allocation4], 0
    // Predicated region
    $region2: #{vit_b16_tail.1} parent=1 // pred_check
      _
    $region3: #{vit_b16_tail.1} parent=1 // pred_check_branch
      %12 = sbr.rel (0) target = $region5
    $region4: #{vit_b16_tail.1} parent=1 // pred_region
      %s14 = ssub.s32 192, 192
      %15 = vsyncadd [#allocation3], %s14
      %s17 = sshll.u32 [#allocation2], 4
      %s18 = int_to_ptr.vmem [resolvable:$true] %s17
      %20 = dma.hbm_to_vmem [thread:$0]  %s0, 192, %s18, [#allocation3]
    $region5: #{vit_b16_tail.1} parent=1 // pred_fallthru
      _
    // Predicated region
    $region6: #{vit_b16_tail.1} parent=1 // pred_check
      _
    $region7: #{vit_b16_tail.1} parent=1 // pred_check_branch
      %22 = sbr.rel (0) target = $region9
    $region8: #{vit_b16_tail.1} parent=1 // pred_region
      %s24 = ssub.s32 49152, 49152
      %25 = vsyncadd [#allocation6], %s24
      %s26 = sshll.u32 [#allocation5], 4
      %s27 = int_to_ptr.vmem [resolvable:$true] %s26
      %32 = dma.hbm_to_vmem [thread:$0]  %s1, 49152, %s27, [#allocation6], 512, 512, 32
    $region9: #{vit_b16_tail.1} parent=1 // pred_fallthru
      _
    // Predicated region
    $region10: #{vit_b16_tail.1} parent=1 // pred_check
      _
    $region11: #{vit_b16_tail.1} parent=1 // pred_check_branch
      %34 = sbr.rel (0) target = $region13
    $region12: #{vit_b16_tail.1} parent=1 // pred_region
      %s36 = ssub.s32 128, 128
      %37 = vsyncadd [#allocation6], %s36
      %s39 = sshll.u32 [#allocation7], 4
      %s40 = int_to_ptr.vmem [resolvable:$true] %s39
      %42 = dma.hbm_to_vmem [thread:$0]  %s2, 128, %s40, [#allocation6]
    $region13: #{vit_b16_tail.1} parent=1 // pred_fallthru
      _
    // Predicated region
    $region14: #{vit_b16_tail.1} parent=1 // pred_check
      _
    $region15: #{vit_b16_tail.1} parent=1 // pred_check_branch
      %44 = sbr.rel (0) target = $region17
    $region16: #{vit_b16_tail.1} parent=1 // pred_region
      %45 = dma.done [#allocation3], 192
    $region17: #{vit_b16_tail.1} parent=1 // pred_fallthru
      _
    // Predicated region
    $region18: #{vit_b16_tail.1} parent=1 // pred_check
      _
    $region19: #{vit_b16_tail.1} parent=1 // pred_check_branch
      %47 = sbr.rel (0) target = $region21
    $region20: #{vit_b16_tail.1} parent=1 // pred_region
      %48 = dma.done [#allocation6], 49152
    $region21: #{vit_b16_tail.1} parent=1 // pred_fallthru
      _
    // Predicated region
    $region22: #{vit_b16_tail.1} parent=1 // pred_check
      _
    $region23: #{vit_b16_tail.1} parent=1 // pred_check_branch
      %50 = sbr.rel (0) target = $region25
    $region24: #{vit_b16_tail.1} parent=1 // pred_region
      %51 = dma.done [#allocation6], 128
    $region25: #{vit_b16_tail.1} parent=1 // pred_fallthru
      _
    %v52 = vld [vmem:[#allocation2] sm:$0xff]
    %v53 = vld [vmem:[#allocation2 + $0x8] sm:$0xf]
    %v56 = vcombine.high %v52, %v52
    %v58 = vunpack.c.l.s4 1983009808
    %v59 = vunpack.c.0.s8 %v58
    %v60 = vlaneseq
    %v61 = vshrl.u32 %v60, 7
    %v62 = vsub.s32 %v59, %v61
    %v63 = vrot.slane %v52, %v62
    %v65 = vunpack.c.l.s4 1983009808
    %v66 = vunpack.c.0.s8 %v65
    %v67 = vlaneseq
    %v68 = vshrl.u32 %v67, 7
    %v69 = vsub.s32 %v66, %v68
    %v70 = vrot.slane %v56, %v69
    %v71 = vcombine.high %v63, %v63
    %v72 = vcombine.high %v70, %v70
    %v74 = vunpack.c.l.s4 1983009808
    %v75 = vunpack.c.0.s8 %v74
    %v76 = vlaneseq
    %v77 = vshrl.u32 %v76, 7
    %v78 = vsub.s32 %v75, %v77
    %v79 = vrot.slane %v53, %v78
    %v80 = vcombine.high %v79, %v79
    %v87 = vpack.c.bf16 %v63, %v63
    %v88 = vpack.c.bf16 %v71, %v71
    %v89 = vpack.c.bf16 %v70, %v70
    %v90 = vpack.c.bf16 %v72, %v72
    %v91 = vpack.c.bf16 %v79, %v79
    %v92 = vpack.c.bf16 %v80, %v80
    %v93 = vld [vmem:[#allocation5] sm:$0xff]
    %v94 = vld [vmem:[#allocation5 + $0x8] sm:$0xff]
    %v95 = vld [vmem:[#allocation5 + $0x10] sm:$0xff]
    %v96 = vld [vmem:[#allocation5 + $0x18] sm:$0xff]
    %v97 = vld [vmem:[#allocation5 + $0x20] sm:$0xff]
    %v98 = vld [vmem:[#allocation5 + $0x28] sm:$0xff]
    %v99 = vld [vmem:[#allocation5 + $0x30] sm:$0xff]
    %v100 = vld [vmem:[#allocation5 + $0x38] sm:$0xff]
    %v101 = vld [vmem:[#allocation5 + $0x40] sm:$0xff]
    %v102 = vld [vmem:[#allocation5 + $0x48] sm:$0xff]
    %v103 = vld [vmem:[#allocation5 + $0x50] sm:$0xff]
    %v104 = vld [vmem:[#allocation5 + $0x58] sm:$0xff]
    %v105 = vld [vmem:[#allocation5 + $0x60] sm:$0xff]
    %v106 = vld [vmem:[#allocation5 + $0x68] sm:$0xff]
    %v107 = vld [vmem:[#allocation5 + $0x70] sm:$0xff]
    %v108 = vld [vmem:[#allocation5 + $0x78] sm:$0xff]
    %v109 = vld [vmem:[#allocation5 + $0x80] sm:$0xff]
    %v110 = vld [vmem:[#allocation5 + $0x88] sm:$0xff]
    %v111 = vld [vmem:[#allocation5 + $0x90] sm:$0xff]
    %v112 = vld [vmem:[#allocation5 + $0x98] sm:$0xff]
    %v113 = vld [vmem:[#allocation5 + $0xa0] sm:$0xff]
    %v114 = vld [vmem:[#allocation5 + $0xa8] sm:$0xff]
    %v115 = vld [vmem:[#allocation5 + $0xb0] sm:$0xff]
    %v116 = vld [vmem:[#allocation5 + $0xb8] sm:$0xff]
    %v117 = vld [vmem:[#allocation5 + $0xc0] sm:$0xff]
    %v118 = vld [vmem:[#allocation5 + $0xc8] sm:$0xff]
    %v119 = vld [vmem:[#allocation5 + $0xd0] sm:$0xff]
    %v120 = vld [vmem:[#allocation5 + $0xd8] sm:$0xff]
    %v121 = vld [vmem:[#allocation5 + $0xe0] sm:$0xff]
    %v122 = vld [vmem:[#allocation5 + $0xe8] sm:$0xff]
    %v123 = vld [vmem:[#allocation5 + $0xf0] sm:$0xff]
    %v124 = vld [vmem:[#allocation5 + $0xf8] sm:$0xff]
    %v125 = vld [vmem:[#allocation5 + $0x100] sm:$0xff]
    %v126 = vld [vmem:[#allocation5 + $0x108] sm:$0xff]
    %v127 = vld [vmem:[#allocation5 + $0x110] sm:$0xff]
    %v128 = vld [vmem:[#allocation5 + $0x118] sm:$0xff]
    %v129 = vld [vmem:[#allocation5 + $0x120] sm:$0xff]
    %v130 = vld [vmem:[#allocation5 + $0x128] sm:$0xff]
    %v131 = vld [vmem:[#allocation5 + $0x130] sm:$0xff]
    %v132 = vld [vmem:[#allocation5 + $0x138] sm:$0xff]
    %v133 = vld [vmem:[#allocation5 + $0x140] sm:$0xff]
    %v134 = vld [vmem:[#allocation5 + $0x148] sm:$0xff]
    %v135 = vld [vmem:[#allocation5 + $0x150] sm:$0xff]
    %v136 = vld [vmem:[#allocation5 + $0x158] sm:$0xff]
    %v137 = vld [vmem:[#allocation5 + $0x160] sm:$0xff]
    %v138 = vld [vmem:[#allocation5 + $0x168] sm:$0xff]
    %v139 = vld [vmem:[#allocation5 + $0x170] sm:$0xff]
    %v140 = vld [vmem:[#allocation5 + $0x178] sm:$0xff]
    %v141 = vld [vmem:[#allocation5 + $0x180] sm:$0xff]
    %v142 = vld [vmem:[#allocation5 + $0x188] sm:$0xff]
    %v143 = vld [vmem:[#allocation5 + $0x190] sm:$0xff]
    %v144 = vld [vmem:[#allocation5 + $0x198] sm:$0xff]
    %v145 = vld [vmem:[#allocation5 + $0x1a0] sm:$0xff]
    %v146 = vld [vmem:[#allocation5 + $0x1a8] sm:$0xff]
    %v147 = vld [vmem:[#allocation5 + $0x1b0] sm:$0xff]
    %v148 = vld [vmem:[#allocation5 + $0x1b8] sm:$0xff]
    %v149 = vld [vmem:[#allocation5 + $0x1c0] sm:$0xff]
    %v150 = vld [vmem:[#allocation5 + $0x1c8] sm:$0xff]
    %v151 = vld [vmem:[#allocation5 + $0x1d0] sm:$0xff]
    %v152 = vld [vmem:[#allocation5 + $0x1d8] sm:$0xff]
    %v153 = vld [vmem:[#allocation5 + $0x1e0] sm:$0xff]
    %v154 = vld [vmem:[#allocation5 + $0x1e8] sm:$0xff]
    %v155 = vld [vmem:[#allocation5 + $0x1f0] sm:$0xff]
    %v156 = vld [vmem:[#allocation5 + $0x1f8] sm:$0xff]
    %v157 = vld [vmem:[#allocation5 + $0x200] sm:$0xff]
    %v158 = vld [vmem:[#allocation5 + $0x208] sm:$0xff]
    %v159 = vld [vmem:[#allocation5 + $0x210] sm:$0xff]
    %v160 = vld [vmem:[#allocation5 + $0x218] sm:$0xff]
    %v161 = vld [vmem:[#allocation5 + $0x220] sm:$0xff]
    %v162 = vld [vmem:[#allocation5 + $0x228] sm:$0xff]
    %v163 = vld [vmem:[#allocation5 + $0x230] sm:$0xff]
    %v164 = vld [vmem:[#allocation5 + $0x238] sm:$0xff]
    %v165 = vld [vmem:[#allocation5 + $0x240] sm:$0xff]
    %v166 = vld [vmem:[#allocation5 + $0x248] sm:$0xff]
    %v167 = vld [vmem:[#allocation5 + $0x250] sm:$0xff]
    %v168 = vld [vmem:[#allocation5 + $0x258] sm:$0xff]
    %v169 = vld [vmem:[#allocation5 + $0x260] sm:$0xff]
    %v170 = vld [vmem:[#allocation5 + $0x268] sm:$0xff]
    %v171 = vld [vmem:[#allocation5 + $0x270] sm:$0xff]
    %v172 = vld [vmem:[#allocation5 + $0x278] sm:$0xff]
    %v173 = vld [vmem:[#allocation5 + $0x280] sm:$0xff]
    %v174 = vld [vmem:[#allocation5 + $0x288] sm:$0xff]
    %v175 = vld [vmem:[#allocation5 + $0x290] sm:$0xff]
    %v176 = vld [vmem:[#allocation5 + $0x298] sm:$0xff]
    %v177 = vld [vmem:[#allocation5 + $0x2a0] sm:$0xff]
    %v178 = vld [vmem:[#allocation5 + $0x2a8] sm:$0xff]
    %v179 = vld [vmem:[#allocation5 + $0x2b0] sm:$0xff]
    %v180 = vld [vmem:[#allocation5 + $0x2b8] sm:$0xff]
    %v181 = vld [vmem:[#allocation5 + $0x2c0] sm:$0xff]
    %v182 = vld [vmem:[#allocation5 + $0x2c8] sm:$0xff]
    %v183 = vld [vmem:[#allocation5 + $0x2d0] sm:$0xff]
    %v184 = vld [vmem:[#allocation5 + $0x2d8] sm:$0xff]
    %v185 = vld [vmem:[#allocation5 + $0x2e0] sm:$0xff]
    %v186 = vld [vmem:[#allocation5 + $0x2e8] sm:$0xff]
    %v187 = vld [vmem:[#allocation5 + $0x2f0] sm:$0xff]
    %v188 = vld [vmem:[#allocation5 + $0x2f8] sm:$0xff]
    %v189 = vld [vmem:[#allocation5 + $0x300] sm:$0xff]
    %v190 = vld [vmem:[#allocation5 + $0x308] sm:$0xff]
    %v191 = vld [vmem:[#allocation5 + $0x310] sm:$0xff]
    %v192 = vld [vmem:[#allocation5 + $0x318] sm:$0xff]
    %v193 = vld [vmem:[#allocation5 + $0x320] sm:$0xff]
    %v194 = vld [vmem:[#allocation5 + $0x328] sm:$0xff]
    %v195 = vld [vmem:[#allocation5 + $0x330] sm:$0xff]
    %v196 = vld [vmem:[#allocation5 + $0x338] sm:$0xff]
    %v197 = vld [vmem:[#allocation5 + $0x340] sm:$0xff]
    %v198 = vld [vmem:[#allocation5 + $0x348] sm:$0xff]
    %v199 = vld [vmem:[#allocation5 + $0x350] sm:$0xff]
    %v200 = vld [vmem:[#allocation5 + $0x358] sm:$0xff]
    %v201 = vld [vmem:[#allocation5 + $0x360] sm:$0xff]
    %v202 = vld [vmem:[#allocation5 + $0x368] sm:$0xff]
    %v203 = vld [vmem:[#allocation5 + $0x370] sm:$0xff]
    %v204 = vld [vmem:[#allocation5 + $0x378] sm:$0xff]
    %v205 = vld [vmem:[#allocation5 + $0x380] sm:$0xff]
    %v206 = vld [vmem:[#allocation5 + $0x388] sm:$0xff]
    %v207 = vld [vmem:[#allocation5 + $0x390] sm:$0xff]
    %v208 = vld [vmem:[#allocation5 + $0x398] sm:$0xff]
    %v209 = vld [vmem:[#allocation5 + $0x3a0] sm:$0xff]
    %v210 = vld [vmem:[#allocation5 + $0x3a8] sm:$0xff]
    %v211 = vld [vmem:[#allocation5 + $0x3b0] sm:$0xff]
    %v212 = vld [vmem:[#allocation5 + $0x3b8] sm:$0xff]
    %v213 = vld [vmem:[#allocation5 + $0x3c0] sm:$0xff]
    %v214 = vld [vmem:[#allocation5 + $0x3c8] sm:$0xff]
    %v215 = vld [vmem:[#allocation5 + $0x3d0] sm:$0xff]
    %v216 = vld [vmem:[#allocation5 + $0x3d8] sm:$0xff]
    %v217 = vld [vmem:[#allocation5 + $0x3e0] sm:$0xff]
    %v218 = vld [vmem:[#allocation5 + $0x3e8] sm:$0xff]
    %v219 = vld [vmem:[#allocation5 + $0x3f0] sm:$0xff]
    %v220 = vld [vmem:[#allocation5 + $0x3f8] sm:$0xff]
    %v221 = vld [vmem:[#allocation5 + $0x400] sm:$0xff]
    %v222 = vld [vmem:[#allocation5 + $0x408] sm:$0xff]
    %v223 = vld [vmem:[#allocation5 + $0x410] sm:$0xff]
    %v224 = vld [vmem:[#allocation5 + $0x418] sm:$0xff]
    %v225 = vld [vmem:[#allocation5 + $0x420] sm:$0xff]
    %v226 = vld [vmem:[#allocation5 + $0x428] sm:$0xff]
    %v227 = vld [vmem:[#allocation5 + $0x430] sm:$0xff]
    %v228 = vld [vmem:[#allocation5 + $0x438] sm:$0xff]
    %v229 = vld [vmem:[#allocation5 + $0x440] sm:$0xff]
    %v230 = vld [vmem:[#allocation5 + $0x448] sm:$0xff]
    %v231 = vld [vmem:[#allocation5 + $0x450] sm:$0xff]
    %v232 = vld [vmem:[#allocation5 + $0x458] sm:$0xff]
    %v233 = vld [vmem:[#allocation5 + $0x460] sm:$0xff]
    %v234 = vld [vmem:[#allocation5 + $0x468] sm:$0xff]
    %v235 = vld [vmem:[#allocation5 + $0x470] sm:$0xff]
    %v236 = vld [vmem:[#allocation5 + $0x478] sm:$0xff]
    %v237 = vld [vmem:[#allocation5 + $0x480] sm:$0xff]
    %v238 = vld [vmem:[#allocation5 + $0x488] sm:$0xff]
    %v239 = vld [vmem:[#allocation5 + $0x490] sm:$0xff]
    %v240 = vld [vmem:[#allocation5 + $0x498] sm:$0xff]
    %v241 = vld [vmem:[#allocation5 + $0x4a0] sm:$0xff]
    %v242 = vld [vmem:[#allocation5 + $0x4a8] sm:$0xff]
    %v243 = vld [vmem:[#allocation5 + $0x4b0] sm:$0xff]
    %v244 = vld [vmem:[#allocation5 + $0x4b8] sm:$0xff]
    %v245 = vld [vmem:[#allocation5 + $0x4c0] sm:$0xff]
    %v246 = vld [vmem:[#allocation5 + $0x4c8] sm:$0xff]
    %v247 = vld [vmem:[#allocation5 + $0x4d0] sm:$0xff]
    %v248 = vld [vmem:[#allocation5 + $0x4d8] sm:$0xff]
    %v249 = vld [vmem:[#allocation5 + $0x4e0] sm:$0xff]
    %v250 = vld [vmem:[#allocation5 + $0x4e8] sm:$0xff]
    %v251 = vld [vmem:[#allocation5 + $0x4f0] sm:$0xff]
    %v252 = vld [vmem:[#allocation5 + $0x4f8] sm:$0xff]
    %v253 = vld [vmem:[#allocation5 + $0x500] sm:$0xff]
    %v254 = vld [vmem:[#allocation5 + $0x508] sm:$0xff]
    %v255 = vld [vmem:[#allocation5 + $0x510] sm:$0xff]
    %v256 = vld [vmem:[#allocation5 + $0x518] sm:$0xff]
    %v257 = vld [vmem:[#allocation5 + $0x520] sm:$0xff]
    %v258 = vld [vmem:[#allocation5 + $0x528] sm:$0xff]
    %v259 = vld [vmem:[#allocation5 + $0x530] sm:$0xff]
    %v260 = vld [vmem:[#allocation5 + $0x538] sm:$0xff]
    %v261 = vld [vmem:[#allocation5 + $0x540] sm:$0xff]
    %v262 = vld [vmem:[#allocation5 + $0x548] sm:$0xff]
    %v263 = vld [vmem:[#allocation5 + $0x550] sm:$0xff]
    %v264 = vld [vmem:[#allocation5 + $0x558] sm:$0xff]
    %v265 = vld [vmem:[#allocation5 + $0x560] sm:$0xff]
    %v266 = vld [vmem:[#allocation5 + $0x568] sm:$0xff]
    %v267 = vld [vmem:[#allocation5 + $0x570] sm:$0xff]
    %v268 = vld [vmem:[#allocation5 + $0x578] sm:$0xff]
    %v269 = vld [vmem:[#allocation5 + $0x580] sm:$0xff]
    %v270 = vld [vmem:[#allocation5 + $0x588] sm:$0xff]
    %v271 = vld [vmem:[#allocation5 + $0x590] sm:$0xff]
    %v272 = vld [vmem:[#allocation5 + $0x598] sm:$0xff]
    %v273 = vld [vmem:[#allocation5 + $0x5a0] sm:$0xff]
    %v274 = vld [vmem:[#allocation5 + $0x5a8] sm:$0xff]
    %v275 = vld [vmem:[#allocation5 + $0x5b0] sm:$0xff]
    %v276 = vld [vmem:[#allocation5 + $0x5b8] sm:$0xff]
    %v277 = vld [vmem:[#allocation5 + $0x5c0] sm:$0xff]
    %v278 = vld [vmem:[#allocation5 + $0x5c8] sm:$0xff]
    %v279 = vld [vmem:[#allocation5 + $0x5d0] sm:$0xff]
    %v280 = vld [vmem:[#allocation5 + $0x5d8] sm:$0xff]
    %v281 = vld [vmem:[#allocation5 + $0x5e0] sm:$0xff]
    %v282 = vld [vmem:[#allocation5 + $0x5e8] sm:$0xff]
    %v283 = vld [vmem:[#allocation5 + $0x5f0] sm:$0xff]
    %v284 = vld [vmem:[#allocation5 + $0x5f8] sm:$0xff]
    %v285 = vld [vmem:[#allocation5 + $0x600] sm:$0xff]
    %v286 = vld [vmem:[#allocation5 + $0x608] sm:$0xff]
    %v287 = vld [vmem:[#allocation5 + $0x610] sm:$0xff]
    %v288 = vld [vmem:[#allocation5 + $0x618] sm:$0xff]
    %v289 = vld [vmem:[#allocation5 + $0x620] sm:$0xff]
    %v290 = vld [vmem:[#allocation5 + $0x628] sm:$0xff]
    %v291 = vld [vmem:[#allocation5 + $0x630] sm:$0xff]
    %v292 = vld [vmem:[#allocation5 + $0x638] sm:$0xff]
    %v293 = vld [vmem:[#allocation5 + $0x640] sm:$0xff]
    %v294 = vld [vmem:[#allocation5 + $0x648] sm:$0xff]
    %v295 = vld [vmem:[#allocation5 + $0x650] sm:$0xff]
    %v296 = vld [vmem:[#allocation5 + $0x658] sm:$0xff]
    %v297 = vld [vmem:[#allocation5 + $0x660] sm:$0xff]
    %v298 = vld [vmem:[#allocation5 + $0x668] sm:$0xff]
    %v299 = vld [vmem:[#allocation5 + $0x670] sm:$0xff]
    %v300 = vld [vmem:[#allocation5 + $0x678] sm:$0xff]
    %v301 = vld [vmem:[#allocation5 + $0x680] sm:$0xff]
    %v302 = vld [vmem:[#allocation5 + $0x688] sm:$0xff]
    %v303 = vld [vmem:[#allocation5 + $0x690] sm:$0xff]
    %v304 = vld [vmem:[#allocation5 + $0x698] sm:$0xff]
    %v305 = vld [vmem:[#allocation5 + $0x6a0] sm:$0xff]
    %v306 = vld [vmem:[#allocation5 + $0x6a8] sm:$0xff]
    %v307 = vld [vmem:[#allocation5 + $0x6b0] sm:$0xff]
    %v308 = vld [vmem:[#allocation5 + $0x6b8] sm:$0xff]
    %v309 = vld [vmem:[#allocation5 + $0x6c0] sm:$0xff]
    %v310 = vld [vmem:[#allocation5 + $0x6c8] sm:$0xff]
    %v311 = vld [vmem:[#allocation5 + $0x6d0] sm:$0xff]
    %v312 = vld [vmem:[#allocation5 + $0x6d8] sm:$0xff]
    %v313 = vld [vmem:[#allocation5 + $0x6e0] sm:$0xff]
    %v314 = vld [vmem:[#allocation5 + $0x6e8] sm:$0xff]
    %v315 = vld [vmem:[#allocation5 + $0x6f0] sm:$0xff]
    %v316 = vld [vmem:[#allocation5 + $0x6f8] sm:$0xff]
    %v317 = vld [vmem:[#allocation5 + $0x700] sm:$0xff]
    %v318 = vld [vmem:[#allocation5 + $0x708] sm:$0xff]
    %v319 = vld [vmem:[#allocation5 + $0x710] sm:$0xff]
    %v320 = vld [vmem:[#allocation5 + $0x718] sm:$0xff]
    %v321 = vld [vmem:[#allocation5 + $0x720] sm:$0xff]
    %v322 = vld [vmem:[#allocation5 + $0x728] sm:$0xff]
    %v323 = vld [vmem:[#allocation5 + $0x730] sm:$0xff]
    %v324 = vld [vmem:[#allocation5 + $0x738] sm:$0xff]
    %v325 = vld [vmem:[#allocation5 + $0x740] sm:$0xff]
    %v326 = vld [vmem:[#allocation5 + $0x748] sm:$0xff]
    %v327 = vld [vmem:[#allocation5 + $0x750] sm:$0xff]
    %v328 = vld [vmem:[#allocation5 + $0x758] sm:$0xff]
    %v329 = vld [vmem:[#allocation5 + $0x760] sm:$0xff]
    %v330 = vld [vmem:[#allocation5 + $0x768] sm:$0xff]
    %v331 = vld [vmem:[#allocation5 + $0x770] sm:$0xff]
    %v332 = vld [vmem:[#allocation5 + $0x778] sm:$0xff]
    %v333 = vld [vmem:[#allocation5 + $0x780] sm:$0xff]
    %v334 = vld [vmem:[#allocation5 + $0x788] sm:$0xff]
    %v335 = vld [vmem:[#allocation5 + $0x790] sm:$0xff]
    %v336 = vld [vmem:[#allocation5 + $0x798] sm:$0xff]
    %v337 = vld [vmem:[#allocation5 + $0x7a0] sm:$0xff]
    %v338 = vld [vmem:[#allocation5 + $0x7a8] sm:$0xff]
    %v339 = vld [vmem:[#allocation5 + $0x7b0] sm:$0xff]
    %v340 = vld [vmem:[#allocation5 + $0x7b8] sm:$0xff]
    %v341 = vld [vmem:[#allocation5 + $0x7c0] sm:$0xff]
    %v342 = vld [vmem:[#allocation5 + $0x7c8] sm:$0xff]
    %v343 = vld [vmem:[#allocation5 + $0x7d0] sm:$0xff]
    %v344 = vld [vmem:[#allocation5 + $0x7d8] sm:$0xff]
    %v345 = vld [vmem:[#allocation5 + $0x7e0] sm:$0xff]
    %v346 = vld [vmem:[#allocation5 + $0x7e8] sm:$0xff]
    %v347 = vld [vmem:[#allocation5 + $0x7f0] sm:$0xff]
    %v348 = vld [vmem:[#allocation5 + $0x7f8] sm:$0xff]
    %v349 = vld [vmem:[#allocation5 + $0x800] sm:$0xff]
    %v350 = vld [vmem:[#allocation5 + $0x808] sm:$0xff]
    %v351 = vld [vmem:[#allocation5 + $0x810] sm:$0xff]
    %v352 = vld [vmem:[#allocation5 + $0x818] sm:$0xff]
    %v353 = vld [vmem:[#allocation5 + $0x820] sm:$0xff]
    %v354 = vld [vmem:[#allocation5 + $0x828] sm:$0xff]
    %v355 = vld [vmem:[#allocation5 + $0x830] sm:$0xff]
    %v356 = vld [vmem:[#allocation5 + $0x838] sm:$0xff]
    %v357 = vld [vmem:[#allocation5 + $0x840] sm:$0xff]
    %v358 = vld [vmem:[#allocation5 + $0x848] sm:$0xff]
    %v359 = vld [vmem:[#allocation5 + $0x850] sm:$0xff]
    %v360 = vld [vmem:[#allocation5 + $0x858] sm:$0xff]
    %v361 = vld [vmem:[#allocation5 + $0x860] sm:$0xff]
    %v362 = vld [vmem:[#allocation5 + $0x868] sm:$0xff]
    %v363 = vld [vmem:[#allocation5 + $0x870] sm:$0xff]
    %v364 = vld [vmem:[#allocation5 + $0x878] sm:$0xff]
    %v365 = vld [vmem:[#allocation5 + $0x880] sm:$0xff]
    %v366 = vld [vmem:[#allocation5 + $0x888] sm:$0xff]
    %v367 = vld [vmem:[#allocation5 + $0x890] sm:$0xff]
    %v368 = vld [vmem:[#allocation5 + $0x898] sm:$0xff]
    %v369 = vld [vmem:[#allocation5 + $0x8a0] sm:$0xff]
    %v370 = vld [vmem:[#allocation5 + $0x8a8] sm:$0xff]
    %v371 = vld [vmem:[#allocation5 + $0x8b0] sm:$0xff]
    %v372 = vld [vmem:[#allocation5 + $0x8b8] sm:$0xff]
    %v373 = vld [vmem:[#allocation5 + $0x8c0] sm:$0xff]
    %v374 = vld [vmem:[#allocation5 + $0x8c8] sm:$0xff]
    %v375 = vld [vmem:[#allocation5 + $0x8d0] sm:$0xff]
    %v376 = vld [vmem:[#allocation5 + $0x8d8] sm:$0xff]
    %v377 = vld [vmem:[#allocation5 + $0x8e0] sm:$0xff]
    %v378 = vld [vmem:[#allocation5 + $0x8e8] sm:$0xff]
    %v379 = vld [vmem:[#allocation5 + $0x8f0] sm:$0xff]
    %v380 = vld [vmem:[#allocation5 + $0x8f8] sm:$0xff]
    %v381 = vld [vmem:[#allocation5 + $0x900] sm:$0xff]
    %v382 = vld [vmem:[#allocation5 + $0x908] sm:$0xff]
    %v383 = vld [vmem:[#allocation5 + $0x910] sm:$0xff]
    %v384 = vld [vmem:[#allocation5 + $0x918] sm:$0xff]
    %v385 = vld [vmem:[#allocation5 + $0x920] sm:$0xff]
    %v386 = vld [vmem:[#allocation5 + $0x928] sm:$0xff]
    %v387 = vld [vmem:[#allocation5 + $0x930] sm:$0xff]
    %v388 = vld [vmem:[#allocation5 + $0x938] sm:$0xff]
    %v389 = vld [vmem:[#allocation5 + $0x940] sm:$0xff]
    %v390 = vld [vmem:[#allocation5 + $0x948] sm:$0xff]
    %v391 = vld [vmem:[#allocation5 + $0x950] sm:$0xff]
    %v392 = vld [vmem:[#allocation5 + $0x958] sm:$0xff]
    %v393 = vld [vmem:[#allocation5 + $0x960] sm:$0xff]
    %v394 = vld [vmem:[#allocation5 + $0x968] sm:$0xff]
    %v395 = vld [vmem:[#allocation5 + $0x970] sm:$0xff]
    %v396 = vld [vmem:[#allocation5 + $0x978] sm:$0xff]
    %v397 = vld [vmem:[#allocation5 + $0x980] sm:$0xff]
    %v398 = vld [vmem:[#allocation5 + $0x988] sm:$0xff]
    %v399 = vld [vmem:[#allocation5 + $0x990] sm:$0xff]
    %v400 = vld [vmem:[#allocation5 + $0x998] sm:$0xff]
    %v401 = vld [vmem:[#allocation5 + $0x9a0] sm:$0xff]
    %v402 = vld [vmem:[#allocation5 + $0x9a8] sm:$0xff]
    %v403 = vld [vmem:[#allocation5 + $0x9b0] sm:$0xff]
    %v404 = vld [vmem:[#allocation5 + $0x9b8] sm:$0xff]
    %v405 = vld [vmem:[#allocation5 + $0x9c0] sm:$0xff]
    %v406 = vld [vmem:[#allocation5 + $0x9c8] sm:$0xff]
    %v407 = vld [vmem:[#allocation5 + $0x9d0] sm:$0xff]
    %v408 = vld [vmem:[#allocation5 + $0x9d8] sm:$0xff]
    %v409 = vld [vmem:[#allocation5 + $0x9e0] sm:$0xff]
    %v410 = vld [vmem:[#allocation5 + $0x9e8] sm:$0xff]
    %v411 = vld [vmem:[#allocation5 + $0x9f0] sm:$0xff]
    %v412 = vld [vmem:[#allocation5 + $0x9f8] sm:$0xff]
    %v413 = vld [vmem:[#allocation5 + $0xa00] sm:$0xff]
    %v414 = vld [vmem:[#allocation5 + $0xa08] sm:$0xff]
    %v415 = vld [vmem:[#allocation5 + $0xa10] sm:$0xff]
    %v416 = vld [vmem:[#allocation5 + $0xa18] sm:$0xff]
    %v417 = vld [vmem:[#allocation5 + $0xa20] sm:$0xff]
    %v418 = vld [vmem:[#allocation5 + $0xa28] sm:$0xff]
    %v419 = vld [vmem:[#allocation5 + $0xa30] sm:$0xff]
    %v420 = vld [vmem:[#allocation5 + $0xa38] sm:$0xff]
    %v421 = vld [vmem:[#allocation5 + $0xa40] sm:$0xff]
    %v422 = vld [vmem:[#allocation5 + $0xa48] sm:$0xff]
    %v423 = vld [vmem:[#allocation5 + $0xa50] sm:$0xff]
    %v424 = vld [vmem:[#allocation5 + $0xa58] sm:$0xff]
    %v425 = vld [vmem:[#allocation5 + $0xa60] sm:$0xff]
    %v426 = vld [vmem:[#allocation5 + $0xa68] sm:$0xff]
    %v427 = vld [vmem:[#allocation5 + $0xa70] sm:$0xff]
    %v428 = vld [vmem:[#allocation5 + $0xa78] sm:$0xff]
    %v429 = vld [vmem:[#allocation5 + $0xa80] sm:$0xff]
    %v430 = vld [vmem:[#allocation5 + $0xa88] sm:$0xff]
    %v431 = vld [vmem:[#allocation5 + $0xa90] sm:$0xff]
    %v432 = vld [vmem:[#allocation5 + $0xa98] sm:$0xff]
    %v433 = vld [vmem:[#allocation5 + $0xaa0] sm:$0xff]
    %v434 = vld [vmem:[#allocation5 + $0xaa8] sm:$0xff]
    %v435 = vld [vmem:[#allocation5 + $0xab0] sm:$0xff]
    %v436 = vld [vmem:[#allocation5 + $0xab8] sm:$0xff]
    %v437 = vld [vmem:[#allocation5 + $0xac0] sm:$0xff]
    %v438 = vld [vmem:[#allocation5 + $0xac8] sm:$0xff]
    %v439 = vld [vmem:[#allocation5 + $0xad0] sm:$0xff]
    %v440 = vld [vmem:[#allocation5 + $0xad8] sm:$0xff]
    %v441 = vld [vmem:[#allocation5 + $0xae0] sm:$0xff]
    %v442 = vld [vmem:[#allocation5 + $0xae8] sm:$0xff]
    %v443 = vld [vmem:[#allocation5 + $0xaf0] sm:$0xff]
    %v444 = vld [vmem:[#allocation5 + $0xaf8] sm:$0xff]
    %v445 = vld [vmem:[#allocation5 + $0xb00] sm:$0xff]
    %v446 = vld [vmem:[#allocation5 + $0xb08] sm:$0xff]
    %v447 = vld [vmem:[#allocation5 + $0xb10] sm:$0xff]
    %v448 = vld [vmem:[#allocation5 + $0xb18] sm:$0xff]
    %v449 = vld [vmem:[#allocation5 + $0xb20] sm:$0xff]
    %v450 = vld [vmem:[#allocation5 + $0xb28] sm:$0xff]
    %v451 = vld [vmem:[#allocation5 + $0xb30] sm:$0xff]
    %v452 = vld [vmem:[#allocation5 + $0xb38] sm:$0xff]
    %v453 = vld [vmem:[#allocation5 + $0xb40] sm:$0xff]
    %v454 = vld [vmem:[#allocation5 + $0xb48] sm:$0xff]
    %v455 = vld [vmem:[#allocation5 + $0xb50] sm:$0xff]
    %v456 = vld [vmem:[#allocation5 + $0xb58] sm:$0xff]
    %v457 = vld [vmem:[#allocation5 + $0xb60] sm:$0xff]
    %v458 = vld [vmem:[#allocation5 + $0xb68] sm:$0xff]
    %v459 = vld [vmem:[#allocation5 + $0xb70] sm:$0xff]
    %v460 = vld [vmem:[#allocation5 + $0xb78] sm:$0xff]
    %v461 = vld [vmem:[#allocation5 + $0xb80] sm:$0xff]
    %v462 = vld [vmem:[#allocation5 + $0xb88] sm:$0xff]
    %v463 = vld [vmem:[#allocation5 + $0xb90] sm:$0xff]
    %v464 = vld [vmem:[#allocation5 + $0xb98] sm:$0xff]
    %v465 = vld [vmem:[#allocation5 + $0xba0] sm:$0xff]
    %v466 = vld [vmem:[#allocation5 + $0xba8] sm:$0xff]
    %v467 = vld [vmem:[#allocation5 + $0xbb0] sm:$0xff]
    %v468 = vld [vmem:[#allocation5 + $0xbb8] sm:$0xff]
    %v469 = vld [vmem:[#allocation5 + $0xbc0] sm:$0xff]
    %v470 = vld [vmem:[#allocation5 + $0xbc8] sm:$0xff]
    %v471 = vld [vmem:[#allocation5 + $0xbd0] sm:$0xff]
    %v472 = vld [vmem:[#allocation5 + $0xbd8] sm:$0xff]
    %v473 = vld [vmem:[#allocation5 + $0xbe0] sm:$0xff]
    %v474 = vld [vmem:[#allocation5 + $0xbe8] sm:$0xff]
    %v475 = vld [vmem:[#allocation5 + $0xbf0] sm:$0xff]
    %v476 = vld [vmem:[#allocation5 + $0xbf8] sm:$0xff]
    %v477 = vld [vmem:[#allocation7] sm:$0xff]
    %v479 = vlaneseq
    %v480 = vshrl.u32 %v479, 7
    %v481 = vsub.s32 0, %v480
    %v482 = vrot.slane %v477, %v481
    %v483 = vlaneseq
    %v484 = vshrl.u32 %v483, 7
    %v485 = vsub.s32 1, %v484
    %v486 = vrot.slane %v477, %v485
    %v487 = vlaneseq
    %v488 = vshrl.u32 %v487, 7
    %v489 = vsub.s32 2, %v488
    %v490 = vrot.slane %v477, %v489
    %v491 = vlaneseq
    %v492 = vshrl.u32 %v491, 7
    %v493 = vsub.s32 3, %v492
    %v494 = vrot.slane %v477, %v493
    %v495 = vlaneseq
    %v496 = vshrl.u32 %v495, 7
    %v497 = vsub.s32 4, %v496
    %v498 = vrot.slane %v477, %v497
    %v499 = vlaneseq
    %v500 = vshrl.u32 %v499, 7
    %v501 = vsub.s32 5, %v500
    %v502 = vrot.slane %v477, %v501
    %v503 = vlaneseq
    %v504 = vshrl.u32 %v503, 7
    %v505 = vsub.s32 6, %v504
    %v506 = vrot.slane %v477, %v505
    %v507 = vlaneseq
    %v508 = vshrl.u32 %v507, 7
    %v509 = vsub.s32 7, %v508
    %v510 = vrot.slane %v477, %v509
    %v903 = vunpack.c.l.b16 %v93
    %v904 = vunpack.c.h.b16 %v93
    %v905 = vunpack.c.l.b16 %v94
    %v906 = vunpack.c.h.b16 %v94
    %v907 = vunpack.c.l.b16 %v95
    %v908 = vunpack.c.h.b16 %v95
    %v909 = vunpack.c.l.b16 %v96
    %v910 = vunpack.c.h.b16 %v96
    %v911 = vunpack.c.l.b16 %v97
    %v912 = vunpack.c.h.b16 %v97
    %v913 = vunpack.c.l.b16 %v98
    %v914 = vunpack.c.h.b16 %v98
    %v915 = vunpack.c.l.b16 %v99
    %v916 = vunpack.c.h.b16 %v99
    %v917 = vunpack.c.l.b16 %v100
    %v918 = vunpack.c.h.b16 %v100
    %v919 = vunpack.c.l.b16 %v101
    %v920 = vunpack.c.h.b16 %v101
    %v921 = vunpack.c.l.b16 %v102
    %v922 = vunpack.c.h.b16 %v102
    %v923 = vunpack.c.l.b16 %v103
    %v924 = vunpack.c.h.b16 %v103
    %v925 = vunpack.c.l.b16 %v104
    %v926 = vunpack.c.h.b16 %v104
    %v927 = vunpack.c.l.b16 %v105
    %v928 = vunpack.c.h.b16 %v105
    %v929 = vunpack.c.l.b16 %v106
    %v930 = vunpack.c.h.b16 %v106
    %v931 = vunpack.c.l.b16 %v107
    %v932 = vunpack.c.h.b16 %v107
    %v933 = vunpack.c.l.b16 %v108
    %v934 = vunpack.c.h.b16 %v108
    %v935 = vunpack.c.l.b16 %v109
    %v936 = vunpack.c.h.b16 %v109
    %v937 = vunpack.c.l.b16 %v110
    %v938 = vunpack.c.h.b16 %v110
    %v939 = vunpack.c.l.b16 %v111
    %v940 = vunpack.c.h.b16 %v111
    %v941 = vunpack.c.l.b16 %v112
    %v942 = vunpack.c.h.b16 %v112
    %v943 = vunpack.c.l.b16 %v113
    %v944 = vunpack.c.h.b16 %v113
    %v945 = vunpack.c.l.b16 %v114
    %v946 = vunpack.c.h.b16 %v114
    %v947 = vunpack.c.l.b16 %v115
    %v948 = vunpack.c.h.b16 %v115
    %v949 = vunpack.c.l.b16 %v116
    %v950 = vunpack.c.h.b16 %v116
    %v951 = vunpack.c.l.b16 %v117
    %v952 = vunpack.c.h.b16 %v117
    %v953 = vunpack.c.l.b16 %v118
    %v954 = vunpack.c.h.b16 %v118
    %v955 = vunpack.c.l.b16 %v119
    %v956 = vunpack.c.h.b16 %v119
    %v957 = vunpack.c.l.b16 %v120
    %v958 = vunpack.c.h.b16 %v120
    %v959 = vunpack.c.l.b16 %v121
    %v960 = vunpack.c.h.b16 %v121
    %v961 = vunpack.c.l.b16 %v122
    %v962 = vunpack.c.h.b16 %v122
    %v963 = vunpack.c.l.b16 %v123
    %v964 = vunpack.c.h.b16 %v123
    %v965 = vunpack.c.l.b16 %v124
    %v966 = vunpack.c.h.b16 %v124
    %v967 = vunpack.c.l.b16 %v125
    %v968 = vunpack.c.h.b16 %v125
    %v969 = vunpack.c.l.b16 %v126
    %v970 = vunpack.c.h.b16 %v126
    %v971 = vunpack.c.l.b16 %v127
    %v972 = vunpack.c.h.b16 %v127
    %v973 = vunpack.c.l.b16 %v128
    %v974 = vunpack.c.h.b16 %v128
    %v975 = vunpack.c.l.b16 %v129
    %v976 = vunpack.c.h.b16 %v129
    %v977 = vunpack.c.l.b16 %v130
    %v978 = vunpack.c.h.b16 %v130
    %v979 = vunpack.c.l.b16 %v131
    %v980 = vunpack.c.h.b16 %v131
    %v981 = vunpack.c.l.b16 %v132
    %v982 = vunpack.c.h.b16 %v132
    %v983 = vunpack.c.l.b16 %v133
    %v984 = vunpack.c.h.b16 %v133
    %v985 = vunpack.c.l.b16 %v134
    %v986 = vunpack.c.h.b16 %v134
    %v987 = vunpack.c.l.b16 %v135
    %v988 = vunpack.c.h.b16 %v135
    %v989 = vunpack.c.l.b16 %v136
    %v990 = vunpack.c.h.b16 %v136
    %v991 = vunpack.c.l.b16 %v137
    %v992 = vunpack.c.h.b16 %v137
    %v993 = vunpack.c.l.b16 %v138
    %v994 = vunpack.c.h.b16 %v138
    %v995 = vunpack.c.l.b16 %v139
    %v996 = vunpack.c.h.b16 %v139
    %v997 = vunpack.c.l.b16 %v140
    %v998 = vunpack.c.h.b16 %v140
    %v999 = vunpack.c.l.b16 %v141
    %v1000 = vunpack.c.h.b16 %v141
    %v1001 = vunpack.c.l.b16 %v142
    %v1002 = vunpack.c.h.b16 %v142
    %v1003 = vunpack.c.l.b16 %v143
    %v1004 = vunpack.c.h.b16 %v143
    %v1005 = vunpack.c.l.b16 %v144
    %v1006 = vunpack.c.h.b16 %v144
    %v1007 = vunpack.c.l.b16 %v145
    %v1008 = vunpack.c.h.b16 %v145
    %v1009 = vunpack.c.l.b16 %v146
    %v1010 = vunpack.c.h.b16 %v146
    %v1011 = vunpack.c.l.b16 %v147
    %v1012 = vunpack.c.h.b16 %v147
    %v1013 = vunpack.c.l.b16 %v148
    %v1014 = vunpack.c.h.b16 %v148
    %v1015 = vunpack.c.l.b16 %v149
    %v1016 = vunpack.c.h.b16 %v149
    %v1017 = vunpack.c.l.b16 %v150
    %v1018 = vunpack.c.h.b16 %v150
    %v1019 = vunpack.c.l.b16 %v151
    %v1020 = vunpack.c.h.b16 %v151
    %v1021 = vunpack.c.l.b16 %v152
    %v1022 = vunpack.c.h.b16 %v152
    %v1023 = vunpack.c.l.b16 %v153
    %v1024 = vunpack.c.h.b16 %v153
    %v1025 = vunpack.c.l.b16 %v154
    %v1026 = vunpack.c.h.b16 %v154
    %v1027 = vunpack.c.l.b16 %v155
    %v1028 = vunpack.c.h.b16 %v155
    %v1029 = vunpack.c.l.b16 %v156
    %v1030 = vunpack.c.h.b16 %v156
    %v1031 = vunpack.c.l.b16 %v157
    %v1032 = vunpack.c.h.b16 %v157
    %v1033 = vunpack.c.l.b16 %v158
    %v1034 = vunpack.c.h.b16 %v158
    %v1035 = vunpack.c.l.b16 %v159
    %v1036 = vunpack.c.h.b16 %v159
    %v1037 = vunpack.c.l.b16 %v160
    %v1038 = vunpack.c.h.b16 %v160
    %v1039 = vunpack.c.l.b16 %v161
    %v1040 = vunpack.c.h.b16 %v161
    %v1041 = vunpack.c.l.b16 %v162
    %v1042 = vunpack.c.h.b16 %v162
    %v1043 = vunpack.c.l.b16 %v163
    %v1044 = vunpack.c.h.b16 %v163
    %v1045 = vunpack.c.l.b16 %v164
    %v1046 = vunpack.c.h.b16 %v164
    %v1047 = vunpack.c.l.b16 %v165
    %v1048 = vunpack.c.h.b16 %v165
    %v1049 = vunpack.c.l.b16 %v166
    %v1050 = vunpack.c.h.b16 %v166
    %v1051 = vunpack.c.l.b16 %v167
    %v1052 = vunpack.c.h.b16 %v167
    %v1053 = vunpack.c.l.b16 %v168
    %v1054 = vunpack.c.h.b16 %v168
    %v1055 = vunpack.c.l.b16 %v169
    %v1056 = vunpack.c.h.b16 %v169
    %v1057 = vunpack.c.l.b16 %v170
    %v1058 = vunpack.c.h.b16 %v170
    %v1059 = vunpack.c.l.b16 %v171
    %v1060 = vunpack.c.h.b16 %v171
    %v1061 = vunpack.c.l.b16 %v172
    %v1062 = vunpack.c.h.b16 %v172
    %v1063 = vunpack.c.l.b16 %v173
    %v1064 = vunpack.c.h.b16 %v173
    %v1065 = vunpack.c.l.b16 %v174
    %v1066 = vunpack.c.h.b16 %v174
    %v1067 = vunpack.c.l.b16 %v175
    %v1068 = vunpack.c.h.b16 %v175
    %v1069 = vunpack.c.l.b16 %v176
    %v1070 = vunpack.c.h.b16 %v176
    %v1071 = vunpack.c.l.b16 %v177
    %v1072 = vunpack.c.h.b16 %v177
    %v1073 = vunpack.c.l.b16 %v178
    %v1074 = vunpack.c.h.b16 %v178
    %v1075 = vunpack.c.l.b16 %v179
    %v1076 = vunpack.c.h.b16 %v179
    %v1077 = vunpack.c.l.b16 %v180
    %v1078 = vunpack.c.h.b16 %v180
    %v1079 = vunpack.c.l.b16 %v181
    %v1080 = vunpack.c.h.b16 %v181
    %v1081 = vunpack.c.l.b16 %v182
    %v1082 = vunpack.c.h.b16 %v182
    %v1083 = vunpack.c.l.b16 %v183
    %v1084 = vunpack.c.h.b16 %v183
    %v1085 = vunpack.c.l.b16 %v184
    %v1086 = vunpack.c.h.b16 %v184
    %v1087 = vunpack.c.l.b16 %v185
    %v1088 = vunpack.c.h.b16 %v185
    %v1089 = vunpack.c.l.b16 %v186
    %v1090 = vunpack.c.h.b16 %v186
    %v1091 = vunpack.c.l.b16 %v187
    %v1092 = vunpack.c.h.b16 %v187
    %v1093 = vunpack.c.l.b16 %v188
    %v1094 = vunpack.c.h.b16 %v188
    %v1095 = vunpack.c.l.b16 %v189
    %v1096 = vunpack.c.h.b16 %v189
    %v1097 = vunpack.c.l.b16 %v190
    %v1098 = vunpack.c.h.b16 %v190
    %v1099 = vunpack.c.l.b16 %v191
    %v1100 = vunpack.c.h.b16 %v191
    %v1101 = vunpack.c.l.b16 %v192
    %v1102 = vunpack.c.h.b16 %v192
    %v1103 = vunpack.c.l.b16 %v193
    %v1104 = vunpack.c.h.b16 %v193
    %v1105 = vunpack.c.l.b16 %v194
    %v1106 = vunpack.c.h.b16 %v194
    %v1107 = vunpack.c.l.b16 %v195
    %v1108 = vunpack.c.h.b16 %v195
    %v1109 = vunpack.c.l.b16 %v196
    %v1110 = vunpack.c.h.b16 %v196
    %v1111 = vunpack.c.l.b16 %v197
    %v1112 = vunpack.c.h.b16 %v197
    %v1113 = vunpack.c.l.b16 %v198
    %v1114 = vunpack.c.h.b16 %v198
    %v1115 = vunpack.c.l.b16 %v199
    %v1116 = vunpack.c.h.b16 %v199
    %v1117 = vunpack.c.l.b16 %v200
    %v1118 = vunpack.c.h.b16 %v200
    %v1119 = vunpack.c.l.b16 %v201
    %v1120 = vunpack.c.h.b16 %v201
    %v1121 = vunpack.c.l.b16 %v202
    %v1122 = vunpack.c.h.b16 %v202
    %v1123 = vunpack.c.l.b16 %v203
    %v1124 = vunpack.c.h.b16 %v203
    %v1125 = vunpack.c.l.b16 %v204
    %v1126 = vunpack.c.h.b16 %v204
    %v1127 = vunpack.c.l.b16 %v205
    %v1128 = vunpack.c.h.b16 %v205
    %v1129 = vunpack.c.l.b16 %v206
    %v1130 = vunpack.c.h.b16 %v206
    %v1131 = vunpack.c.l.b16 %v207
    %v1132 = vunpack.c.h.b16 %v207
    %v1133 = vunpack.c.l.b16 %v208
    %v1134 = vunpack.c.h.b16 %v208
    %v1135 = vunpack.c.l.b16 %v209
    %v1136 = vunpack.c.h.b16 %v209
    %v1137 = vunpack.c.l.b16 %v210
    %v1138 = vunpack.c.h.b16 %v210
    %v1139 = vunpack.c.l.b16 %v211
    %v1140 = vunpack.c.h.b16 %v211
    %v1141 = vunpack.c.l.b16 %v212
    %v1142 = vunpack.c.h.b16 %v212
    %v1143 = vunpack.c.l.b16 %v213
    %v1144 = vunpack.c.h.b16 %v213
    %v1145 = vunpack.c.l.b16 %v214
    %v1146 = vunpack.c.h.b16 %v214
    %v1147 = vunpack.c.l.b16 %v215
    %v1148 = vunpack.c.h.b16 %v215
    %v1149 = vunpack.c.l.b16 %v216
    %v1150 = vunpack.c.h.b16 %v216
    %v1151 = vunpack.c.l.b16 %v217
    %v1152 = vunpack.c.h.b16 %v217
    %v1153 = vunpack.c.l.b16 %v218
    %v1154 = vunpack.c.h.b16 %v218
    %v1155 = vunpack.c.l.b16 %v219
    %v1156 = vunpack.c.h.b16 %v219
    %v1157 = vunpack.c.l.b16 %v220
    %v1158 = vunpack.c.h.b16 %v220
    %v1159 = vunpack.c.l.b16 %v221
    %v1160 = vunpack.c.h.b16 %v221
    %v1161 = vunpack.c.l.b16 %v222
    %v1162 = vunpack.c.h.b16 %v222
    %v1163 = vunpack.c.l.b16 %v223
    %v1164 = vunpack.c.h.b16 %v223
    %v1165 = vunpack.c.l.b16 %v224
    %v1166 = vunpack.c.h.b16 %v224
    %v1167 = vunpack.c.l.b16 %v225
    %v1168 = vunpack.c.h.b16 %v225
    %v1169 = vunpack.c.l.b16 %v226
    %v1170 = vunpack.c.h.b16 %v226
    %v1171 = vunpack.c.l.b16 %v227
    %v1172 = vunpack.c.h.b16 %v227
    %v1173 = vunpack.c.l.b16 %v228
    %v1174 = vunpack.c.h.b16 %v228
    %v1175 = vunpack.c.l.b16 %v229
    %v1176 = vunpack.c.h.b16 %v229
    %v1177 = vunpack.c.l.b16 %v230
    %v1178 = vunpack.c.h.b16 %v230
    %v1179 = vunpack.c.l.b16 %v231
    %v1180 = vunpack.c.h.b16 %v231
    %v1181 = vunpack.c.l.b16 %v232
    %v1182 = vunpack.c.h.b16 %v232
    %v1183 = vunpack.c.l.b16 %v233
    %v1184 = vunpack.c.h.b16 %v233
    %v1185 = vunpack.c.l.b16 %v234
    %v1186 = vunpack.c.h.b16 %v234
    %v1187 = vunpack.c.l.b16 %v235
    %v1188 = vunpack.c.h.b16 %v235
    %v1189 = vunpack.c.l.b16 %v236
    %v1190 = vunpack.c.h.b16 %v236
    %v1191 = vunpack.c.l.b16 %v237
    %v1192 = vunpack.c.h.b16 %v237
    %v1193 = vunpack.c.l.b16 %v238
    %v1194 = vunpack.c.h.b16 %v238
    %v1195 = vunpack.c.l.b16 %v239
    %v1196 = vunpack.c.h.b16 %v239
    %v1197 = vunpack.c.l.b16 %v240
    %v1198 = vunpack.c.h.b16 %v240
    %v1199 = vunpack.c.l.b16 %v241
    %v1200 = vunpack.c.h.b16 %v241
    %v1201 = vunpack.c.l.b16 %v242
    %v1202 = vunpack.c.h.b16 %v242
    %v1203 = vunpack.c.l.b16 %v243
    %v1204 = vunpack.c.h.b16 %v243
    %v1205 = vunpack.c.l.b16 %v244
    %v1206 = vunpack.c.h.b16 %v244
    %v1207 = vunpack.c.l.b16 %v245
    %v1208 = vunpack.c.h.b16 %v245
    %v1209 = vunpack.c.l.b16 %v246
    %v1210 = vunpack.c.h.b16 %v246
    %v1211 = vunpack.c.l.b16 %v247
    %v1212 = vunpack.c.h.b16 %v247
    %v1213 = vunpack.c.l.b16 %v248
    %v1214 = vunpack.c.h.b16 %v248
    %v1215 = vunpack.c.l.b16 %v249
    %v1216 = vunpack.c.h.b16 %v249
    %v1217 = vunpack.c.l.b16 %v250
    %v1218 = vunpack.c.h.b16 %v250
    %v1219 = vunpack.c.l.b16 %v251
    %v1220 = vunpack.c.h.b16 %v251
    %v1221 = vunpack.c.l.b16 %v252
    %v1222 = vunpack.c.h.b16 %v252
    %v1223 = vunpack.c.l.b16 %v253
    %v1224 = vunpack.c.h.b16 %v253
    %v1225 = vunpack.c.l.b16 %v254
    %v1226 = vunpack.c.h.b16 %v254
    %v1227 = vunpack.c.l.b16 %v255
    %v1228 = vunpack.c.h.b16 %v255
    %v1229 = vunpack.c.l.b16 %v256
    %v1230 = vunpack.c.h.b16 %v256
    %v1231 = vunpack.c.l.b16 %v257
    %v1232 = vunpack.c.h.b16 %v257
    %v1233 = vunpack.c.l.b16 %v258
    %v1234 = vunpack.c.h.b16 %v258
    %v1235 = vunpack.c.l.b16 %v259
    %v1236 = vunpack.c.h.b16 %v259
    %v1237 = vunpack.c.l.b16 %v260
    %v1238 = vunpack.c.h.b16 %v260
    %v1239 = vunpack.c.l.b16 %v261
    %v1240 = vunpack.c.h.b16 %v261
    %v1241 = vunpack.c.l.b16 %v262
    %v1242 = vunpack.c.h.b16 %v262
    %v1243 = vunpack.c.l.b16 %v263
    %v1244 = vunpack.c.h.b16 %v263
    %v1245 = vunpack.c.l.b16 %v264
    %v1246 = vunpack.c.h.b16 %v264
    %v1247 = vunpack.c.l.b16 %v265
    %v1248 = vunpack.c.h.b16 %v265
    %v1249 = vunpack.c.l.b16 %v266
    %v1250 = vunpack.c.h.b16 %v266
    %v1251 = vunpack.c.l.b16 %v267
    %v1252 = vunpack.c.h.b16 %v267
    %v1253 = vunpack.c.l.b16 %v268
    %v1254 = vunpack.c.h.b16 %v268
    %v1255 = vunpack.c.l.b16 %v269
    %v1256 = vunpack.c.h.b16 %v269
    %v1257 = vunpack.c.l.b16 %v270
    %v1258 = vunpack.c.h.b16 %v270
    %v1259 = vunpack.c.l.b16 %v271
    %v1260 = vunpack.c.h.b16 %v271
    %v1261 = vunpack.c.l.b16 %v272
    %v1262 = vunpack.c.h.b16 %v272
    %v1263 = vunpack.c.l.b16 %v273
    %v1264 = vunpack.c.h.b16 %v273
    %v1265 = vunpack.c.l.b16 %v274
    %v1266 = vunpack.c.h.b16 %v274
    %v1267 = vunpack.c.l.b16 %v275
    %v1268 = vunpack.c.h.b16 %v275
    %v1269 = vunpack.c.l.b16 %v276
    %v1270 = vunpack.c.h.b16 %v276
    %v1271 = vunpack.c.l.b16 %v277
    %v1272 = vunpack.c.h.b16 %v277
    %v1273 = vunpack.c.l.b16 %v278
    %v1274 = vunpack.c.h.b16 %v278
    %v1275 = vunpack.c.l.b16 %v279
    %v1276 = vunpack.c.h.b16 %v279
    %v1277 = vunpack.c.l.b16 %v280
    %v1278 = vunpack.c.h.b16 %v280
    %v1279 = vunpack.c.l.b16 %v281
    %v1280 = vunpack.c.h.b16 %v281
    %v1281 = vunpack.c.l.b16 %v282
    %v1282 = vunpack.c.h.b16 %v282
    %v1283 = vunpack.c.l.b16 %v283
    %v1284 = vunpack.c.h.b16 %v283
    %v1285 = vunpack.c.l.b16 %v284
    %v1286 = vunpack.c.h.b16 %v284
    %v1287 = vunpack.c.l.b16 %v285
    %v1288 = vunpack.c.h.b16 %v285
    %v1289 = vunpack.c.l.b16 %v286
    %v1290 = vunpack.c.h.b16 %v286
    %v1291 = vunpack.c.l.b16 %v287
    %v1292 = vunpack.c.h.b16 %v287
    %v1293 = vunpack.c.l.b16 %v288
    %v1294 = vunpack.c.h.b16 %v288
    %v1295 = vunpack.c.l.b16 %v289
    %v1296 = vunpack.c.h.b16 %v289
    %v1297 = vunpack.c.l.b16 %v290
    %v1298 = vunpack.c.h.b16 %v290
    %v1299 = vunpack.c.l.b16 %v291
    %v1300 = vunpack.c.h.b16 %v291
    %v1301 = vunpack.c.l.b16 %v292
    %v1302 = vunpack.c.h.b16 %v292
    %v1303 = vunpack.c.l.b16 %v293
    %v1304 = vunpack.c.h.b16 %v293
    %v1305 = vunpack.c.l.b16 %v294
    %v1306 = vunpack.c.h.b16 %v294
    %v1307 = vunpack.c.l.b16 %v295
    %v1308 = vunpack.c.h.b16 %v295
    %v1309 = vunpack.c.l.b16 %v296
    %v1310 = vunpack.c.h.b16 %v296
    %v1311 = vunpack.c.l.b16 %v297
    %v1312 = vunpack.c.h.b16 %v297
    %v1313 = vunpack.c.l.b16 %v298
    %v1314 = vunpack.c.h.b16 %v298
    %v1315 = vunpack.c.l.b16 %v299
    %v1316 = vunpack.c.h.b16 %v299
    %v1317 = vunpack.c.l.b16 %v300
    %v1318 = vunpack.c.h.b16 %v300
    %v1319 = vunpack.c.l.b16 %v301
    %v1320 = vunpack.c.h.b16 %v301
    %v1321 = vunpack.c.l.b16 %v302
    %v1322 = vunpack.c.h.b16 %v302
    %v1323 = vunpack.c.l.b16 %v303
    %v1324 = vunpack.c.h.b16 %v303
    %v1325 = vunpack.c.l.b16 %v304
    %v1326 = vunpack.c.h.b16 %v304
    %v1327 = vunpack.c.l.b16 %v305
    %v1328 = vunpack.c.h.b16 %v305
    %v1329 = vunpack.c.l.b16 %v306
    %v1330 = vunpack.c.h.b16 %v306
    %v1331 = vunpack.c.l.b16 %v307
    %v1332 = vunpack.c.h.b16 %v307
    %v1333 = vunpack.c.l.b16 %v308
    %v1334 = vunpack.c.h.b16 %v308
    %v1335 = vunpack.c.l.b16 %v309
    %v1336 = vunpack.c.h.b16 %v309
    %v1337 = vunpack.c.l.b16 %v310
    %v1338 = vunpack.c.h.b16 %v310
    %v1339 = vunpack.c.l.b16 %v311
    %v1340 = vunpack.c.h.b16 %v311
    %v1341 = vunpack.c.l.b16 %v312
    %v1342 = vunpack.c.h.b16 %v312
    %v1343 = vunpack.c.l.b16 %v313
    %v1344 = vunpack.c.h.b16 %v313
    %v1345 = vunpack.c.l.b16 %v314
    %v1346 = vunpack.c.h.b16 %v314
    %v1347 = vunpack.c.l.b16 %v315
    %v1348 = vunpack.c.h.b16 %v315
    %v1349 = vunpack.c.l.b16 %v316
    %v1350 = vunpack.c.h.b16 %v316
    %v1351 = vunpack.c.l.b16 %v317
    %v1352 = vunpack.c.h.b16 %v317
    %v1353 = vunpack.c.l.b16 %v318
    %v1354 = vunpack.c.h.b16 %v318
    %v1355 = vunpack.c.l.b16 %v319
    %v1356 = vunpack.c.h.b16 %v319
    %v1357 = vunpack.c.l.b16 %v320
    %v1358 = vunpack.c.h.b16 %v320
    %v1359 = vunpack.c.l.b16 %v321
    %v1360 = vunpack.c.h.b16 %v321
    %v1361 = vunpack.c.l.b16 %v322
    %v1362 = vunpack.c.h.b16 %v322
    %v1363 = vunpack.c.l.b16 %v323
    %v1364 = vunpack.c.h.b16 %v323
    %v1365 = vunpack.c.l.b16 %v324
    %v1366 = vunpack.c.h.b16 %v324
    %v1367 = vunpack.c.l.b16 %v325
    %v1368 = vunpack.c.h.b16 %v325
    %v1369 = vunpack.c.l.b16 %v326
    %v1370 = vunpack.c.h.b16 %v326
    %v1371 = vunpack.c.l.b16 %v327
    %v1372 = vunpack.c.h.b16 %v327
    %v1373 = vunpack.c.l.b16 %v328
    %v1374 = vunpack.c.h.b16 %v328
    %v1375 = vunpack.c.l.b16 %v329
    %v1376 = vunpack.c.h.b16 %v329
    %v1377 = vunpack.c.l.b16 %v330
    %v1378 = vunpack.c.h.b16 %v330
    %v1379 = vunpack.c.l.b16 %v331
    %v1380 = vunpack.c.h.b16 %v331
    %v1381 = vunpack.c.l.b16 %v332
    %v1382 = vunpack.c.h.b16 %v332
    %v1383 = vunpack.c.l.b16 %v333
    %v1384 = vunpack.c.h.b16 %v333
    %v1385 = vunpack.c.l.b16 %v334
    %v1386 = vunpack.c.h.b16 %v334
    %v1387 = vunpack.c.l.b16 %v335
    %v1388 = vunpack.c.h.b16 %v335
    %v1389 = vunpack.c.l.b16 %v336
    %v1390 = vunpack.c.h.b16 %v336
    %v1391 = vunpack.c.l.b16 %v337
    %v1392 = vunpack.c.h.b16 %v337
    %v1393 = vunpack.c.l.b16 %v338
    %v1394 = vunpack.c.h.b16 %v338
    %v1395 = vunpack.c.l.b16 %v339
    %v1396 = vunpack.c.h.b16 %v339
    %v1397 = vunpack.c.l.b16 %v340
    %v1398 = vunpack.c.h.b16 %v340
    %v1399 = vunpack.c.l.b16 %v341
    %v1400 = vunpack.c.h.b16 %v341
    %v1401 = vunpack.c.l.b16 %v342
    %v1402 = vunpack.c.h.b16 %v342
    %v1403 = vunpack.c.l.b16 %v343
    %v1404 = vunpack.c.h.b16 %v343
    %v1405 = vunpack.c.l.b16 %v344
    %v1406 = vunpack.c.h.b16 %v344
    %v1407 = vunpack.c.l.b16 %v345
    %v1408 = vunpack.c.h.b16 %v345
    %v1409 = vunpack.c.l.b16 %v346
    %v1410 = vunpack.c.h.b16 %v346
    %v1411 = vunpack.c.l.b16 %v347
    %v1412 = vunpack.c.h.b16 %v347
    %v1413 = vunpack.c.l.b16 %v348
    %v1414 = vunpack.c.h.b16 %v348
    %v1415 = vunpack.c.l.b16 %v349
    %v1416 = vunpack.c.h.b16 %v349
    %v1417 = vunpack.c.l.b16 %v350
    %v1418 = vunpack.c.h.b16 %v350
    %v1419 = vunpack.c.l.b16 %v351
    %v1420 = vunpack.c.h.b16 %v351
    %v1421 = vunpack.c.l.b16 %v352
    %v1422 = vunpack.c.h.b16 %v352
    %v1423 = vunpack.c.l.b16 %v353
    %v1424 = vunpack.c.h.b16 %v353
    %v1425 = vunpack.c.l.b16 %v354
    %v1426 = vunpack.c.h.b16 %v354
    %v1427 = vunpack.c.l.b16 %v355
    %v1428 = vunpack.c.h.b16 %v355
    %v1429 = vunpack.c.l.b16 %v356
    %v1430 = vunpack.c.h.b16 %v356
    %v1431 = vunpack.c.l.b16 %v357
    %v1432 = vunpack.c.h.b16 %v357
    %v1433 = vunpack.c.l.b16 %v358
    %v1434 = vunpack.c.h.b16 %v358
    %v1435 = vunpack.c.l.b16 %v359
    %v1436 = vunpack.c.h.b16 %v359
    %v1437 = vunpack.c.l.b16 %v360
    %v1438 = vunpack.c.h.b16 %v360
    %v1439 = vunpack.c.l.b16 %v361
    %v1440 = vunpack.c.h.b16 %v361
    %v1441 = vunpack.c.l.b16 %v362
    %v1442 = vunpack.c.h.b16 %v362
    %v1443 = vunpack.c.l.b16 %v363
    %v1444 = vunpack.c.h.b16 %v363
    %v1445 = vunpack.c.l.b16 %v364
    %v1446 = vunpack.c.h.b16 %v364
    %v1447 = vunpack.c.l.b16 %v365
    %v1448 = vunpack.c.h.b16 %v365
    %v1449 = vunpack.c.l.b16 %v366
    %v1450 = vunpack.c.h.b16 %v366
    %v1451 = vunpack.c.l.b16 %v367
    %v1452 = vunpack.c.h.b16 %v367
    %v1453 = vunpack.c.l.b16 %v368
    %v1454 = vunpack.c.h.b16 %v368
    %v1455 = vunpack.c.l.b16 %v369
    %v1456 = vunpack.c.h.b16 %v369
    %v1457 = vunpack.c.l.b16 %v370
    %v1458 = vunpack.c.h.b16 %v370
    %v1459 = vunpack.c.l.b16 %v371
    %v1460 = vunpack.c.h.b16 %v371
    %v1461 = vunpack.c.l.b16 %v372
    %v1462 = vunpack.c.h.b16 %v372
    %v1463 = vunpack.c.l.b16 %v373
    %v1464 = vunpack.c.h.b16 %v373
    %v1465 = vunpack.c.l.b16 %v374
    %v1466 = vunpack.c.h.b16 %v374
    %v1467 = vunpack.c.l.b16 %v375
    %v1468 = vunpack.c.h.b16 %v375
    %v1469 = vunpack.c.l.b16 %v376
    %v1470 = vunpack.c.h.b16 %v376
    %v1471 = vunpack.c.l.b16 %v377
    %v1472 = vunpack.c.h.b16 %v377
    %v1473 = vunpack.c.l.b16 %v378
    %v1474 = vunpack.c.h.b16 %v378
    %v1475 = vunpack.c.l.b16 %v379
    %v1476 = vunpack.c.h.b16 %v379
    %v1477 = vunpack.c.l.b16 %v380
    %v1478 = vunpack.c.h.b16 %v380
    %v1479 = vunpack.c.l.b16 %v381
    %v1480 = vunpack.c.h.b16 %v381
    %v1481 = vunpack.c.l.b16 %v382
    %v1482 = vunpack.c.h.b16 %v382
    %v1483 = vunpack.c.l.b16 %v383
    %v1484 = vunpack.c.h.b16 %v383
    %v1485 = vunpack.c.l.b16 %v384
    %v1486 = vunpack.c.h.b16 %v384
    %v1487 = vunpack.c.l.b16 %v385
    %v1488 = vunpack.c.h.b16 %v385
    %v1489 = vunpack.c.l.b16 %v386
    %v1490 = vunpack.c.h.b16 %v386
    %v1491 = vunpack.c.l.b16 %v387
    %v1492 = vunpack.c.h.b16 %v387
    %v1493 = vunpack.c.l.b16 %v388
    %v1494 = vunpack.c.h.b16 %v388
    %v1495 = vunpack.c.l.b16 %v389
    %v1496 = vunpack.c.h.b16 %v389
    %v1497 = vunpack.c.l.b16 %v390
    %v1498 = vunpack.c.h.b16 %v390
    %v1499 = vunpack.c.l.b16 %v391
    %v1500 = vunpack.c.h.b16 %v391
    %v1501 = vunpack.c.l.b16 %v392
    %v1502 = vunpack.c.h.b16 %v392
    %v1503 = vunpack.c.l.b16 %v393
    %v1504 = vunpack.c.h.b16 %v393
    %v1505 = vunpack.c.l.b16 %v394
    %v1506 = vunpack.c.h.b16 %v394
    %v1507 = vunpack.c.l.b16 %v395
    %v1508 = vunpack.c.h.b16 %v395
    %v1509 = vunpack.c.l.b16 %v396
    %v1510 = vunpack.c.h.b16 %v396
    %v1511 = vunpack.c.l.b16 %v397
    %v1512 = vunpack.c.h.b16 %v397
    %v1513 = vunpack.c.l.b16 %v398
    %v1514 = vunpack.c.h.b16 %v398
    %v1515 = vunpack.c.l.b16 %v399
    %v1516 = vunpack.c.h.b16 %v399
    %v1517 = vunpack.c.l.b16 %v400
    %v1518 = vunpack.c.h.b16 %v400
    %v1519 = vunpack.c.l.b16 %v401
    %v1520 = vunpack.c.h.b16 %v401
    %v1521 = vunpack.c.l.b16 %v402
    %v1522 = vunpack.c.h.b16 %v402
    %v1523 = vunpack.c.l.b16 %v403
    %v1524 = vunpack.c.h.b16 %v403
    %v1525 = vunpack.c.l.b16 %v404
    %v1526 = vunpack.c.h.b16 %v404
    %v1527 = vunpack.c.l.b16 %v405
    %v1528 = vunpack.c.h.b16 %v405
    %v1529 = vunpack.c.l.b16 %v406
    %v1530 = vunpack.c.h.b16 %v406
    %v1531 = vunpack.c.l.b16 %v407
    %v1532 = vunpack.c.h.b16 %v407
    %v1533 = vunpack.c.l.b16 %v408
    %v1534 = vunpack.c.h.b16 %v408
    %v1535 = vunpack.c.l.b16 %v409
    %v1536 = vunpack.c.h.b16 %v409
    %v1537 = vunpack.c.l.b16 %v410
    %v1538 = vunpack.c.h.b16 %v410
    %v1539 = vunpack.c.l.b16 %v411
    %v1540 = vunpack.c.h.b16 %v411
    %v1541 = vunpack.c.l.b16 %v412
    %v1542 = vunpack.c.h.b16 %v412
    %v1543 = vunpack.c.l.b16 %v413
    %v1544 = vunpack.c.h.b16 %v413
    %v1545 = vunpack.c.l.b16 %v414
    %v1546 = vunpack.c.h.b16 %v414
    %v1547 = vunpack.c.l.b16 %v415
    %v1548 = vunpack.c.h.b16 %v415
    %v1549 = vunpack.c.l.b16 %v416
    %v1550 = vunpack.c.h.b16 %v416
    %v1551 = vunpack.c.l.b16 %v417
    %v1552 = vunpack.c.h.b16 %v417
    %v1553 = vunpack.c.l.b16 %v418
    %v1554 = vunpack.c.h.b16 %v418
    %v1555 = vunpack.c.l.b16 %v419
    %v1556 = vunpack.c.h.b16 %v419
    %v1557 = vunpack.c.l.b16 %v420
    %v1558 = vunpack.c.h.b16 %v420
    %v1559 = vunpack.c.l.b16 %v421
    %v1560 = vunpack.c.h.b16 %v421
    %v1561 = vunpack.c.l.b16 %v422
    %v1562 = vunpack.c.h.b16 %v422
    %v1563 = vunpack.c.l.b16 %v423
    %v1564 = vunpack.c.h.b16 %v423
    %v1565 = vunpack.c.l.b16 %v424
    %v1566 = vunpack.c.h.b16 %v424
    %v1567 = vunpack.c.l.b16 %v425
    %v1568 = vunpack.c.h.b16 %v425
    %v1569 = vunpack.c.l.b16 %v426
    %v1570 = vunpack.c.h.b16 %v426
    %v1571 = vunpack.c.l.b16 %v427
    %v1572 = vunpack.c.h.b16 %v427
    %v1573 = vunpack.c.l.b16 %v428
    %v1574 = vunpack.c.h.b16 %v428
    %v1575 = vunpack.c.l.b16 %v429
    %v1576 = vunpack.c.h.b16 %v429
    %v1577 = vunpack.c.l.b16 %v430
    %v1578 = vunpack.c.h.b16 %v430
    %v1579 = vunpack.c.l.b16 %v431
    %v1580 = vunpack.c.h.b16 %v431
    %v1581 = vunpack.c.l.b16 %v432
    %v1582 = vunpack.c.h.b16 %v432
    %v1583 = vunpack.c.l.b16 %v433
    %v1584 = vunpack.c.h.b16 %v433
    %v1585 = vunpack.c.l.b16 %v434
    %v1586 = vunpack.c.h.b16 %v434
    %v1587 = vunpack.c.l.b16 %v435
    %v1588 = vunpack.c.h.b16 %v435
    %v1589 = vunpack.c.l.b16 %v436
    %v1590 = vunpack.c.h.b16 %v436
    %v1591 = vunpack.c.l.b16 %v437
    %v1592 = vunpack.c.h.b16 %v437
    %v1593 = vunpack.c.l.b16 %v438
    %v1594 = vunpack.c.h.b16 %v438
    %v1595 = vunpack.c.l.b16 %v439
    %v1596 = vunpack.c.h.b16 %v439
    %v1597 = vunpack.c.l.b16 %v440
    %v1598 = vunpack.c.h.b16 %v440
    %v1599 = vunpack.c.l.b16 %v441
    %v1600 = vunpack.c.h.b16 %v441
    %v1601 = vunpack.c.l.b16 %v442
    %v1602 = vunpack.c.h.b16 %v442
    %v1603 = vunpack.c.l.b16 %v443
    %v1604 = vunpack.c.h.b16 %v443
    %v1605 = vunpack.c.l.b16 %v444
    %v1606 = vunpack.c.h.b16 %v444
    %v1607 = vunpack.c.l.b16 %v445
    %v1608 = vunpack.c.h.b16 %v445
    %v1609 = vunpack.c.l.b16 %v446
    %v1610 = vunpack.c.h.b16 %v446
    %v1611 = vunpack.c.l.b16 %v447
    %v1612 = vunpack.c.h.b16 %v447
    %v1613 = vunpack.c.l.b16 %v448
    %v1614 = vunpack.c.h.b16 %v448
    %v1615 = vunpack.c.l.b16 %v449
    %v1616 = vunpack.c.h.b16 %v449
    %v1617 = vunpack.c.l.b16 %v450
    %v1618 = vunpack.c.h.b16 %v450
    %v1619 = vunpack.c.l.b16 %v451
    %v1620 = vunpack.c.h.b16 %v451
    %v1621 = vunpack.c.l.b16 %v452
    %v1622 = vunpack.c.h.b16 %v452
    %v1623 = vunpack.c.l.b16 %v453
    %v1624 = vunpack.c.h.b16 %v453
    %v1625 = vunpack.c.l.b16 %v454
    %v1626 = vunpack.c.h.b16 %v454
    %v1627 = vunpack.c.l.b16 %v455
    %v1628 = vunpack.c.h.b16 %v455
    %v1629 = vunpack.c.l.b16 %v456
    %v1630 = vunpack.c.h.b16 %v456
    %v1631 = vunpack.c.l.b16 %v457
    %v1632 = vunpack.c.h.b16 %v457
    %v1633 = vunpack.c.l.b16 %v458
    %v1634 = vunpack.c.h.b16 %v458
    %v1635 = vunpack.c.l.b16 %v459
    %v1636 = vunpack.c.h.b16 %v459
    %v1637 = vunpack.c.l.b16 %v460
    %v1638 = vunpack.c.h.b16 %v460
    %v1639 = vunpack.c.l.b16 %v461
    %v1640 = vunpack.c.h.b16 %v461
    %v1641 = vunpack.c.l.b16 %v462
    %v1642 = vunpack.c.h.b16 %v462
    %v1643 = vunpack.c.l.b16 %v463
    %v1644 = vunpack.c.h.b16 %v463
    %v1645 = vunpack.c.l.b16 %v464
    %v1646 = vunpack.c.h.b16 %v464
    %v1647 = vunpack.c.l.b16 %v465
    %v1648 = vunpack.c.h.b16 %v465
    %v1649 = vunpack.c.l.b16 %v466
    %v1650 = vunpack.c.h.b16 %v466
    %v1651 = vunpack.c.l.b16 %v467
    %v1652 = vunpack.c.h.b16 %v467
    %v1653 = vunpack.c.l.b16 %v468
    %v1654 = vunpack.c.h.b16 %v468
    %v1655 = vunpack.c.l.b16 %v469
    %v1656 = vunpack.c.h.b16 %v469
    %v1657 = vunpack.c.l.b16 %v470
    %v1658 = vunpack.c.h.b16 %v470
    %v1659 = vunpack.c.l.b16 %v471
    %v1660 = vunpack.c.h.b16 %v471
    %v1661 = vunpack.c.l.b16 %v472
    %v1662 = vunpack.c.h.b16 %v472
    %v1663 = vunpack.c.l.b16 %v473
    %v1664 = vunpack.c.h.b16 %v473
    %v1665 = vunpack.c.l.b16 %v474
    %v1666 = vunpack.c.h.b16 %v474
    %v1667 = vunpack.c.l.b16 %v475
    %v1668 = vunpack.c.h.b16 %v475
    %v1669 = vunpack.c.l.b16 %v476
    %v1670 = vunpack.c.h.b16 %v476
    %v1671 = vpack.c.b16 %v911, %v903
    %v1672 = vpack.c.b16 %v912, %v904
    %v1673 = vpack.c.b16 %v913, %v905
    %v1674 = vpack.c.b16 %v914, %v906
    %v1675 = vpack.c.b16 %v915, %v907
    %v1676 = vpack.c.b16 %v916, %v908
    %v1677 = vpack.c.b16 %v917, %v909
    %v1678 = vpack.c.b16 %v918, %v910
    %v1679 = vpack.c.b16 %v927, %v919
    %v1680 = vpack.c.b16 %v928, %v920
    %v1681 = vpack.c.b16 %v929, %v921
    %v1682 = vpack.c.b16 %v930, %v922
    %v1683 = vpack.c.b16 %v931, %v923
    %v1684 = vpack.c.b16 %v932, %v924
    %v1685 = vpack.c.b16 %v933, %v925
    %v1686 = vpack.c.b16 %v934, %v926
    %v1687 = vpack.c.b16 %v943, %v935
    %v1688 = vpack.c.b16 %v944, %v936
    %v1689 = vpack.c.b16 %v945, %v937
    %v1690 = vpack.c.b16 %v946, %v938
    %v1691 = vpack.c.b16 %v947, %v939
    %v1692 = vpack.c.b16 %v948, %v940
    %v1693 = vpack.c.b16 %v949, %v941
    %v1694 = vpack.c.b16 %v950, %v942
    %v1695 = vpack.c.b16 %v959, %v951
    %v1696 = vpack.c.b16 %v960, %v952
    %v1697 = vpack.c.b16 %v961, %v953
    %v1698 = vpack.c.b16 %v962, %v954
    %v1699 = vpack.c.b16 %v963, %v955
    %v1700 = vpack.c.b16 %v964, %v956
    %v1701 = vpack.c.b16 %v965, %v957
    %v1702 = vpack.c.b16 %v966, %v958
    %v1703 = vpack.c.b16 %v975, %v967
    %v1704 = vpack.c.b16 %v976, %v968
    %v1705 = vpack.c.b16 %v977, %v969
    %v1706 = vpack.c.b16 %v978, %v970
    %v1707 = vpack.c.b16 %v979, %v971
    %v1708 = vpack.c.b16 %v980, %v972
    %v1709 = vpack.c.b16 %v981, %v973
    %v1710 = vpack.c.b16 %v982, %v974
    %v1711 = vpack.c.b16 %v991, %v983
    %v1712 = vpack.c.b16 %v992, %v984
    %v1713 = vpack.c.b16 %v993, %v985
    %v1714 = vpack.c.b16 %v994, %v986
    %v1715 = vpack.c.b16 %v995, %v987
    %v1716 = vpack.c.b16 %v996, %v988
    %v1717 = vpack.c.b16 %v997, %v989
    %v1718 = vpack.c.b16 %v998, %v990
    %v1719 = vpack.c.b16 %v1007, %v999
    %v1720 = vpack.c.b16 %v1008, %v1000
    %v1721 = vpack.c.b16 %v1009, %v1001
    %v1722 = vpack.c.b16 %v1010, %v1002
    %v1723 = vpack.c.b16 %v1011, %v1003
    %v1724 = vpack.c.b16 %v1012, %v1004
    %v1725 = vpack.c.b16 %v1013, %v1005
    %v1726 = vpack.c.b16 %v1014, %v1006
    %v1727 = vpack.c.b16 %v1023, %v1015
    %v1728 = vpack.c.b16 %v1024, %v1016
    %v1729 = vpack.c.b16 %v1025, %v1017
    %v1730 = vpack.c.b16 %v1026, %v1018
    %v1731 = vpack.c.b16 %v1027, %v1019
    %v1732 = vpack.c.b16 %v1028, %v1020
    %v1733 = vpack.c.b16 %v1029, %v1021
    %v1734 = vpack.c.b16 %v1030, %v1022
    %v1735 = vpack.c.b16 %v1039, %v1031
    %v1736 = vpack.c.b16 %v1040, %v1032
    %v1737 = vpack.c.b16 %v1041, %v1033
    %v1738 = vpack.c.b16 %v1042, %v1034
    %v1739 = vpack.c.b16 %v1043, %v1035
    %v1740 = vpack.c.b16 %v1044, %v1036
    %v1741 = vpack.c.b16 %v1045, %v1037
    %v1742 = vpack.c.b16 %v1046, %v1038
    %v1743 = vpack.c.b16 %v1055, %v1047
    %v1744 = vpack.c.b16 %v1056, %v1048
    %v1745 = vpack.c.b16 %v1057, %v1049
    %v1746 = vpack.c.b16 %v1058, %v1050
    %v1747 = vpack.c.b16 %v1059, %v1051
    %v1748 = vpack.c.b16 %v1060, %v1052
    %v1749 = vpack.c.b16 %v1061, %v1053
    %v1750 = vpack.c.b16 %v1062, %v1054
    %v1751 = vpack.c.b16 %v1071, %v1063
    %v1752 = vpack.c.b16 %v1072, %v1064
    %v1753 = vpack.c.b16 %v1073, %v1065
    %v1754 = vpack.c.b16 %v1074, %v1066
    %v1755 = vpack.c.b16 %v1075, %v1067
    %v1756 = vpack.c.b16 %v1076, %v1068
    %v1757 = vpack.c.b16 %v1077, %v1069
    %v1758 = vpack.c.b16 %v1078, %v1070
    %v1759 = vpack.c.b16 %v1087, %v1079
    %v1760 = vpack.c.b16 %v1088, %v1080
    %v1761 = vpack.c.b16 %v1089, %v1081
    %v1762 = vpack.c.b16 %v1090, %v1082
    %v1763 = vpack.c.b16 %v1091, %v1083
    %v1764 = vpack.c.b16 %v1092, %v1084
    %v1765 = vpack.c.b16 %v1093, %v1085
    %v1766 = vpack.c.b16 %v1094, %v1086
    %v1767 = vpack.c.b16 %v1103, %v1095
    %v1768 = vpack.c.b16 %v1104, %v1096
    %v1769 = vpack.c.b16 %v1105, %v1097
    %v1770 = vpack.c.b16 %v1106, %v1098
    %v1771 = vpack.c.b16 %v1107, %v1099
    %v1772 = vpack.c.b16 %v1108, %v1100
    %v1773 = vpack.c.b16 %v1109, %v1101
    %v1774 = vpack.c.b16 %v1110, %v1102
    %v1775 = vpack.c.b16 %v1119, %v1111
    %v1776 = vpack.c.b16 %v1120, %v1112
    %v1777 = vpack.c.b16 %v1121, %v1113
    %v1778 = vpack.c.b16 %v1122, %v1114
    %v1779 = vpack.c.b16 %v1123, %v1115
    %v1780 = vpack.c.b16 %v1124, %v1116
    %v1781 = vpack.c.b16 %v1125, %v1117
    %v1782 = vpack.c.b16 %v1126, %v1118
    %v1783 = vpack.c.b16 %v1135, %v1127
    %v1784 = vpack.c.b16 %v1136, %v1128
    %v1785 = vpack.c.b16 %v1137, %v1129
    %v1786 = vpack.c.b16 %v1138, %v1130
    %v1787 = vpack.c.b16 %v1139, %v1131
    %v1788 = vpack.c.b16 %v1140, %v1132
    %v1789 = vpack.c.b16 %v1141, %v1133
    %v1790 = vpack.c.b16 %v1142, %v1134
    %v1791 = vpack.c.b16 %v1151, %v1143
    %v1792 = vpack.c.b16 %v1152, %v1144
    %v1793 = vpack.c.b16 %v1153, %v1145
    %v1794 = vpack.c.b16 %v1154, %v1146
    %v1795 = vpack.c.b16 %v1155, %v1147
    %v1796 = vpack.c.b16 %v1156, %v1148
    %v1797 = vpack.c.b16 %v1157, %v1149
    %v1798 = vpack.c.b16 %v1158, %v1150
    %v1799 = vpack.c.b16 %v1167, %v1159
    %v1800 = vpack.c.b16 %v1168, %v1160
    %v1801 = vpack.c.b16 %v1169, %v1161
    %v1802 = vpack.c.b16 %v1170, %v1162
    %v1803 = vpack.c.b16 %v1171, %v1163
    %v1804 = vpack.c.b16 %v1172, %v1164
    %v1805 = vpack.c.b16 %v1173, %v1165
    %v1806 = vpack.c.b16 %v1174, %v1166
    %v1807 = vpack.c.b16 %v1183, %v1175
    %v1808 = vpack.c.b16 %v1184, %v1176
    %v1809 = vpack.c.b16 %v1185, %v1177
    %v1810 = vpack.c.b16 %v1186, %v1178
    %v1811 = vpack.c.b16 %v1187, %v1179
    %v1812 = vpack.c.b16 %v1188, %v1180
    %v1813 = vpack.c.b16 %v1189, %v1181
    %v1814 = vpack.c.b16 %v1190, %v1182
    %v1815 = vpack.c.b16 %v1199, %v1191
    %v1816 = vpack.c.b16 %v1200, %v1192
    %v1817 = vpack.c.b16 %v1201, %v1193
    %v1818 = vpack.c.b16 %v1202, %v1194
    %v1819 = vpack.c.b16 %v1203, %v1195
    %v1820 = vpack.c.b16 %v1204, %v1196
    %v1821 = vpack.c.b16 %v1205, %v1197
    %v1822 = vpack.c.b16 %v1206, %v1198
    %v1823 = vpack.c.b16 %v1215, %v1207
    %v1824 = vpack.c.b16 %v1216, %v1208
    %v1825 = vpack.c.b16 %v1217, %v1209
    %v1826 = vpack.c.b16 %v1218, %v1210
    %v1827 = vpack.c.b16 %v1219, %v1211
    %v1828 = vpack.c.b16 %v1220, %v1212
    %v1829 = vpack.c.b16 %v1221, %v1213
    %v1830 = vpack.c.b16 %v1222, %v1214
    %v1831 = vpack.c.b16 %v1231, %v1223
    %v1832 = vpack.c.b16 %v1232, %v1224
    %v1833 = vpack.c.b16 %v1233, %v1225
    %v1834 = vpack.c.b16 %v1234, %v1226
    %v1835 = vpack.c.b16 %v1235, %v1227
    %v1836 = vpack.c.b16 %v1236, %v1228
    %v1837 = vpack.c.b16 %v1237, %v1229
    %v1838 = vpack.c.b16 %v1238, %v1230
    %v1839 = vpack.c.b16 %v1247, %v1239
    %v1840 = vpack.c.b16 %v1248, %v1240
    %v1841 = vpack.c.b16 %v1249, %v1241
    %v1842 = vpack.c.b16 %v1250, %v1242
    %v1843 = vpack.c.b16 %v1251, %v1243
    %v1844 = vpack.c.b16 %v1252, %v1244
    %v1845 = vpack.c.b16 %v1253, %v1245
    %v1846 = vpack.c.b16 %v1254, %v1246
    %v1847 = vpack.c.b16 %v1263, %v1255
    %v1848 = vpack.c.b16 %v1264, %v1256
    %v1849 = vpack.c.b16 %v1265, %v1257
    %v1850 = vpack.c.b16 %v1266, %v1258
    %v1851 = vpack.c.b16 %v1267, %v1259
    %v1852 = vpack.c.b16 %v1268, %v1260
    %v1853 = vpack.c.b16 %v1269, %v1261
    %v1854 = vpack.c.b16 %v1270, %v1262
    %v1855 = vpack.c.b16 %v1279, %v1271
    %v1856 = vpack.c.b16 %v1280, %v1272
    %v1857 = vpack.c.b16 %v1281, %v1273
    %v1858 = vpack.c.b16 %v1282, %v1274
    %v1859 = vpack.c.b16 %v1283, %v1275
    %v1860 = vpack.c.b16 %v1284, %v1276
    %v1861 = vpack.c.b16 %v1285, %v1277
    %v1862 = vpack.c.b16 %v1286, %v1278
    %v1863 = vpack.c.b16 %v1295, %v1287
    %v1864 = vpack.c.b16 %v1296, %v1288
    %v1865 = vpack.c.b16 %v1297, %v1289
    %v1866 = vpack.c.b16 %v1298, %v1290
    %v1867 = vpack.c.b16 %v1299, %v1291
    %v1868 = vpack.c.b16 %v1300, %v1292
    %v1869 = vpack.c.b16 %v1301, %v1293
    %v1870 = vpack.c.b16 %v1302, %v1294
    %v1871 = vpack.c.b16 %v1311, %v1303
    %v1872 = vpack.c.b16 %v1312, %v1304
    %v1873 = vpack.c.b16 %v1313, %v1305
    %v1874 = vpack.c.b16 %v1314, %v1306
    %v1875 = vpack.c.b16 %v1315, %v1307
    %v1876 = vpack.c.b16 %v1316, %v1308
    %v1877 = vpack.c.b16 %v1317, %v1309
    %v1878 = vpack.c.b16 %v1318, %v1310
    %v1879 = vpack.c.b16 %v1327, %v1319
    %v1880 = vpack.c.b16 %v1328, %v1320
    %v1881 = vpack.c.b16 %v1329, %v1321
    %v1882 = vpack.c.b16 %v1330, %v1322
    %v1883 = vpack.c.b16 %v1331, %v1323
    %v1884 = vpack.c.b16 %v1332, %v1324
    %v1885 = vpack.c.b16 %v1333, %v1325
    %v1886 = vpack.c.b16 %v1334, %v1326
    %v1887 = vpack.c.b16 %v1343, %v1335
    %v1888 = vpack.c.b16 %v1344, %v1336
    %v1889 = vpack.c.b16 %v1345, %v1337
    %v1890 = vpack.c.b16 %v1346, %v1338
    %v1891 = vpack.c.b16 %v1347, %v1339
    %v1892 = vpack.c.b16 %v1348, %v1340
    %v1893 = vpack.c.b16 %v1349, %v1341
    %v1894 = vpack.c.b16 %v1350, %v1342
    %v1895 = vpack.c.b16 %v1359, %v1351
    %v1896 = vpack.c.b16 %v1360, %v1352
    %v1897 = vpack.c.b16 %v1361, %v1353
    %v1898 = vpack.c.b16 %v1362, %v1354
    %v1899 = vpack.c.b16 %v1363, %v1355
    %v1900 = vpack.c.b16 %v1364, %v1356
    %v1901 = vpack.c.b16 %v1365, %v1357
    %v1902 = vpack.c.b16 %v1366, %v1358
    %v1903 = vpack.c.b16 %v1375, %v1367
    %v1904 = vpack.c.b16 %v1376, %v1368
    %v1905 = vpack.c.b16 %v1377, %v1369
    %v1906 = vpack.c.b16 %v1378, %v1370
    %v1907 = vpack.c.b16 %v1379, %v1371
    %v1908 = vpack.c.b16 %v1380, %v1372
    %v1909 = vpack.c.b16 %v1381, %v1373
    %v1910 = vpack.c.b16 %v1382, %v1374
    %v1911 = vpack.c.b16 %v1391, %v1383
    %v1912 = vpack.c.b16 %v1392, %v1384
    %v1913 = vpack.c.b16 %v1393, %v1385
    %v1914 = vpack.c.b16 %v1394, %v1386
    %v1915 = vpack.c.b16 %v1395, %v1387
    %v1916 = vpack.c.b16 %v1396, %v1388
    %v1917 = vpack.c.b16 %v1397, %v1389
    %v1918 = vpack.c.b16 %v1398, %v1390
    %v1919 = vpack.c.b16 %v1407, %v1399
    %v1920 = vpack.c.b16 %v1408, %v1400
    %v1921 = vpack.c.b16 %v1409, %v1401
    %v1922 = vpack.c.b16 %v1410, %v1402
    %v1923 = vpack.c.b16 %v1411, %v1403
    %v1924 = vpack.c.b16 %v1412, %v1404
    %v1925 = vpack.c.b16 %v1413, %v1405
    %v1926 = vpack.c.b16 %v1414, %v1406
    %v1927 = vpack.c.b16 %v1423, %v1415
    %v1928 = vpack.c.b16 %v1424, %v1416
    %v1929 = vpack.c.b16 %v1425, %v1417
    %v1930 = vpack.c.b16 %v1426, %v1418
    %v1931 = vpack.c.b16 %v1427, %v1419
    %v1932 = vpack.c.b16 %v1428, %v1420
    %v1933 = vpack.c.b16 %v1429, %v1421
    %v1934 = vpack.c.b16 %v1430, %v1422
    %v1935 = vpack.c.b16 %v1439, %v1431
    %v1936 = vpack.c.b16 %v1440, %v1432
    %v1937 = vpack.c.b16 %v1441, %v1433
    %v1938 = vpack.c.b16 %v1442, %v1434
    %v1939 = vpack.c.b16 %v1443, %v1435
    %v1940 = vpack.c.b16 %v1444, %v1436
    %v1941 = vpack.c.b16 %v1445, %v1437
    %v1942 = vpack.c.b16 %v1446, %v1438
    %v1943 = vpack.c.b16 %v1455, %v1447
    %v1944 = vpack.c.b16 %v1456, %v1448
    %v1945 = vpack.c.b16 %v1457, %v1449
    %v1946 = vpack.c.b16 %v1458, %v1450
    %v1947 = vpack.c.b16 %v1459, %v1451
    %v1948 = vpack.c.b16 %v1460, %v1452
    %v1949 = vpack.c.b16 %v1461, %v1453
    %v1950 = vpack.c.b16 %v1462, %v1454
    %v1951 = vpack.c.b16 %v1471, %v1463
    %v1952 = vpack.c.b16 %v1472, %v1464
    %v1953 = vpack.c.b16 %v1473, %v1465
    %v1954 = vpack.c.b16 %v1474, %v1466
    %v1955 = vpack.c.b16 %v1475, %v1467
    %v1956 = vpack.c.b16 %v1476, %v1468
    %v1957 = vpack.c.b16 %v1477, %v1469
    %v1958 = vpack.c.b16 %v1478, %v1470
    %v1959 = vpack.c.b16 %v1487, %v1479
    %v1960 = vpack.c.b16 %v1488, %v1480
    %v1961 = vpack.c.b16 %v1489, %v1481
    %v1962 = vpack.c.b16 %v1490, %v1482
    %v1963 = vpack.c.b16 %v1491, %v1483
    %v1964 = vpack.c.b16 %v1492, %v1484
    %v1965 = vpack.c.b16 %v1493, %v1485
    %v1966 = vpack.c.b16 %v1494, %v1486
    %v1967 = vpack.c.b16 %v1503, %v1495
    %v1968 = vpack.c.b16 %v1504, %v1496
    %v1969 = vpack.c.b16 %v1505, %v1497
    %v1970 = vpack.c.b16 %v1506, %v1498
    %v1971 = vpack.c.b16 %v1507, %v1499
    %v1972 = vpack.c.b16 %v1508, %v1500
    %v1973 = vpack.c.b16 %v1509, %v1501
    %v1974 = vpack.c.b16 %v1510, %v1502
    %v1975 = vpack.c.b16 %v1519, %v1511
    %v1976 = vpack.c.b16 %v1520, %v1512
    %v1977 = vpack.c.b16 %v1521, %v1513
    %v1978 = vpack.c.b16 %v1522, %v1514
    %v1979 = vpack.c.b16 %v1523, %v1515
    %v1980 = vpack.c.b16 %v1524, %v1516
    %v1981 = vpack.c.b16 %v1525, %v1517
    %v1982 = vpack.c.b16 %v1526, %v1518
    %v1983 = vpack.c.b16 %v1535, %v1527
    %v1984 = vpack.c.b16 %v1536, %v1528
    %v1985 = vpack.c.b16 %v1537, %v1529
    %v1986 = vpack.c.b16 %v1538, %v1530
    %v1987 = vpack.c.b16 %v1539, %v1531
    %v1988 = vpack.c.b16 %v1540, %v1532
    %v1989 = vpack.c.b16 %v1541, %v1533
    %v1990 = vpack.c.b16 %v1542, %v1534
    %v1991 = vpack.c.b16 %v1551, %v1543
    %v1992 = vpack.c.b16 %v1552, %v1544
    %v1993 = vpack.c.b16 %v1553, %v1545
    %v1994 = vpack.c.b16 %v1554, %v1546
    %v1995 = vpack.c.b16 %v1555, %v1547
    %v1996 = vpack.c.b16 %v1556, %v1548
    %v1997 = vpack.c.b16 %v1557, %v1549
    %v1998 = vpack.c.b16 %v1558, %v1550
    %v1999 = vpack.c.b16 %v1567, %v1559
    %v2000 = vpack.c.b16 %v1568, %v1560
    %v2001 = vpack.c.b16 %v1569, %v1561
    %v2002 = vpack.c.b16 %v1570, %v1562
    %v2003 = vpack.c.b16 %v1571, %v1563
    %v2004 = vpack.c.b16 %v1572, %v1564
    %v2005 = vpack.c.b16 %v1573, %v1565
    %v2006 = vpack.c.b16 %v1574, %v1566
    %v2007 = vpack.c.b16 %v1583, %v1575
    %v2008 = vpack.c.b16 %v1584, %v1576
    %v2009 = vpack.c.b16 %v1585, %v1577
    %v2010 = vpack.c.b16 %v1586, %v1578
    %v2011 = vpack.c.b16 %v1587, %v1579
    %v2012 = vpack.c.b16 %v1588, %v1580
    %v2013 = vpack.c.b16 %v1589, %v1581
    %v2014 = vpack.c.b16 %v1590, %v1582
    %v2015 = vpack.c.b16 %v1599, %v1591
    %v2016 = vpack.c.b16 %v1600, %v1592
    %v2017 = vpack.c.b16 %v1601, %v1593
    %v2018 = vpack.c.b16 %v1602, %v1594
    %v2019 = vpack.c.b16 %v1603, %v1595
    %v2020 = vpack.c.b16 %v1604, %v1596
    %v2021 = vpack.c.b16 %v1605, %v1597
    %v2022 = vpack.c.b16 %v1606, %v1598
    %v2023 = vpack.c.b16 %v1615, %v1607
    %v2024 = vpack.c.b16 %v1616, %v1608
    %v2025 = vpack.c.b16 %v1617, %v1609
    %v2026 = vpack.c.b16 %v1618, %v1610
    %v2027 = vpack.c.b16 %v1619, %v1611
    %v2028 = vpack.c.b16 %v1620, %v1612
    %v2029 = vpack.c.b16 %v1621, %v1613
    %v2030 = vpack.c.b16 %v1622, %v1614
    %v2031 = vpack.c.b16 %v1631, %v1623
    %v2032 = vpack.c.b16 %v1632, %v1624
    %v2033 = vpack.c.b16 %v1633, %v1625
    %v2034 = vpack.c.b16 %v1634, %v1626
    %v2035 = vpack.c.b16 %v1635, %v1627
    %v2036 = vpack.c.b16 %v1636, %v1628
    %v2037 = vpack.c.b16 %v1637, %v1629
    %v2038 = vpack.c.b16 %v1638, %v1630
    %v2039 = vpack.c.b16 %v1647, %v1639
    %v2040 = vpack.c.b16 %v1648, %v1640
    %v2041 = vpack.c.b16 %v1649, %v1641
    %v2042 = vpack.c.b16 %v1650, %v1642
    %v2043 = vpack.c.b16 %v1651, %v1643
    %v2044 = vpack.c.b16 %v1652, %v1644
    %v2045 = vpack.c.b16 %v1653, %v1645
    %v2046 = vpack.c.b16 %v1654, %v1646
    %v2047 = vpack.c.b16 %v1663, %v1655
    %v2048 = vpack.c.b16 %v1664, %v1656
    %v2049 = vpack.c.b16 %v1665, %v1657
    %v2050 = vpack.c.b16 %v1666, %v1658
    %v2051 = vpack.c.b16 %v1667, %v1659
    %v2052 = vpack.c.b16 %v1668, %v1660
    %v2053 = vpack.c.b16 %v1669, %v1661
    %v2054 = vpack.c.b16 %v1670, %v1662
    %2439 = vmatprep.subr.bf16.mxu0 %v1672
    %2440 = vmatpush1.bf16.msra.mxu0 %v1671
    %2441 = vmatprep.subr.bf16.mxu0 %v1680
    %2442 = vmatpush1.bf16.msra.mxu0 %v1679
    %2443 = vmatprep.subr.bf16.mxu0 %v1688
    %2444 = vmatpush1.bf16.msra.mxu0 %v1687
    %2445 = vmatprep.subr.bf16.mxu0 %v1696
    %2446 = vmatpush1.bf16.msra.mxu0 %v1695
    %2447 = vmatprep.subr.bf16.mxu0 %v1704
    %2448 = vmatpush1.bf16.msra.mxu0 %v1703
    %2449 = vmatprep.subr.bf16.mxu0 %v1712
    %2450 = vmatpush1.bf16.msra.mxu0 %v1711
    %2451 = vmatprep.subr.bf16.mxu0 %v1720
    %2452 = vmatpush1.bf16.msra.mxu0 %v1719
    %2453 = vmatprep.subr.bf16.mxu0 %v1728
    %2454 = vmatpush1.bf16.msra.mxu0 %v1727
    %2455 = vmatprep.subr.bf16.mxu0 %v1736
    %2456 = vmatpush1.bf16.msra.mxu0 %v1735
    %2457 = vmatprep.subr.bf16.mxu0 %v1744
    %2458 = vmatpush1.bf16.msra.mxu0 %v1743
    %2459 = vmatprep.subr.bf16.mxu0 %v1752
    %2460 = vmatpush1.bf16.msra.mxu0 %v1751
    %2461 = vmatprep.subr.bf16.mxu0 %v1760
    %2462 = vmatpush1.bf16.msra.mxu0 %v1759
    %2463 = vmatprep.subr.bf16.mxu0 %v1768
    %2464 = vmatpush1.bf16.msra.mxu0 %v1767
    %2465 = vmatprep.subr.bf16.mxu0 %v1776
    %2466 = vmatpush1.bf16.msra.mxu0 %v1775
    %2467 = vmatprep.subr.bf16.mxu0 %v1784
    %2468 = vmatpush1.bf16.msra.mxu0 %v1783
    %2469 = vmatprep.subr.bf16.mxu0 %v1792
    %2470 = vmatpush1.bf16.msra.mxu0 %v1791
    %2471 = vmatprep.mubr.bf16.mxu0 %v88
    %2472 = vmatmul.mubr.bf16.gmra.mrb[0].mxu0 %v87
    %v2473 = vpop.f32.mrb[0].mxu0
    %v2474 = vadd.f32 %v482, %v2473
    %v2475 = vpop.f32.mrb[0].mxu0
    %v2476 = vadd.f32 %v486, %v2475
    %v2477 = vpop.f32.mrb[0].mxu0
    %v2478 = vpop.f32.mrb[0].mxu0
    %2479 = vdwg.mxu0
    %2480 = vmatprep.subr.bf16.mxu0 %v1800
    %2481 = vmatpush1.bf16.msra.mxu0 %v1799
    %2482 = vmatprep.subr.bf16.mxu0 %v1808
    %2483 = vmatpush1.bf16.msra.mxu0 %v1807
    %2484 = vmatprep.subr.bf16.mxu0 %v1816
    %2485 = vmatpush1.bf16.msra.mxu0 %v1815
    %2486 = vmatprep.subr.bf16.mxu0 %v1824
    %2487 = vmatpush1.bf16.msra.mxu0 %v1823
    %2488 = vmatprep.subr.bf16.mxu0 %v1832
    %2489 = vmatpush1.bf16.msra.mxu0 %v1831
    %2490 = vmatprep.subr.bf16.mxu0 %v1840
    %2491 = vmatpush1.bf16.msra.mxu0 %v1839
    %2492 = vmatprep.subr.bf16.mxu0 %v1848
    %2493 = vmatpush1.bf16.msra.mxu0 %v1847
    %2494 = vmatprep.subr.bf16.mxu0 %v1856
    %2495 = vmatpush1.bf16.msra.mxu0 %v1855
    %2496 = vmatprep.subr.bf16.mxu0 %v1864
    %2497 = vmatpush1.bf16.msra.mxu0 %v1863
    %2498 = vmatprep.subr.bf16.mxu0 %v1872
    %2499 = vmatpush1.bf16.msra.mxu0 %v1871
    %2500 = vmatprep.subr.bf16.mxu0 %v1880
    %2501 = vmatpush1.bf16.msra.mxu0 %v1879
    %2502 = vmatprep.subr.bf16.mxu0 %v1888
    %2503 = vmatpush1.bf16.msra.mxu0 %v1887
    %2504 = vmatprep.subr.bf16.mxu0 %v1896
    %2505 = vmatpush1.bf16.msra.mxu0 %v1895
    %2506 = vmatprep.subr.bf16.mxu0 %v1904
    %2507 = vmatpush1.bf16.msra.mxu0 %v1903
    %2508 = vmatprep.subr.bf16.mxu0 %v1912
    %2509 = vmatpush1.bf16.msra.mxu0 %v1911
    %2510 = vmatprep.subr.bf16.mxu0 %v1920
    %2511 = vmatpush1.bf16.msra.mxu0 %v1919
    %2512 = vmatprep.mubr.bf16.mxu0 %v90
    %2513 = vmatmul.mubr.bf16.gmra.mrb[0].mxu0 %v89
    %v2514 = vpop.f32.mrb[0].mxu0
    %v2515 = vadd.f32 %v2474, %v2514
    %v2516 = vpop.f32.mrb[0].mxu0
    %v2517 = vadd.f32 %v2476, %v2516
    %v2518 = vpop.f32.mrb[0].mxu0
    %v2519 = vpop.f32.mrb[0].mxu0
    %2520 = vdwg.mxu0
    %2521 = vmatprep.subr.bf16.mxu0 %v1928
    %2522 = vmatpush1.bf16.msra.mxu0 %v1927
    %2523 = vmatprep.subr.bf16.mxu0 %v1936
    %2524 = vmatpush1.bf16.msra.mxu0 %v1935
    %2525 = vmatprep.subr.bf16.mxu0 %v1944
    %2526 = vmatpush1.bf16.msra.mxu0 %v1943
    %2527 = vmatprep.subr.bf16.mxu0 %v1952
    %2528 = vmatpush1.bf16.msra.mxu0 %v1951
    %2529 = vmatprep.subr.bf16.mxu0 %v1960
    %2530 = vmatpush1.bf16.msra.mxu0 %v1959
    %2531 = vmatprep.subr.bf16.mxu0 %v1968
    %2532 = vmatpush1.bf16.msra.mxu0 %v1967
    %2533 = vmatprep.subr.bf16.mxu0 %v1976
    %2534 = vmatpush1.bf16.msra.mxu0 %v1975
    %2535 = vmatprep.subr.bf16.mxu0 %v1984
    %2536 = vmatpush1.bf16.msra.mxu0 %v1983
    %2537 = vmatprep.subr.bf16.mxu0 %v1992
    %2538 = vmatpush1.bf16.msra.mxu0 %v1991
    %2539 = vmatprep.subr.bf16.mxu0 %v2000
    %2540 = vmatpush1.bf16.msra.mxu0 %v1999
    %2541 = vmatprep.subr.bf16.mxu0 %v2008
    %2542 = vmatpush1.bf16.msra.mxu0 %v2007
    %2543 = vmatprep.subr.bf16.mxu0 %v2016
    %2544 = vmatpush1.bf16.msra.mxu0 %v2015
    %2545 = vmatprep.subr.bf16.mxu0 %v2024
    %2546 = vmatpush1.bf16.msra.mxu0 %v2023
    %2547 = vmatprep.subr.bf16.mxu0 %v2032
    %2548 = vmatpush1.bf16.msra.mxu0 %v2031
    %2549 = vmatprep.subr.bf16.mxu0 %v2040
    %2550 = vmatpush1.bf16.msra.mxu0 %v2039
    %2551 = vmatprep.subr.bf16.mxu0 %v2048
    %2552 = vmatpush1.bf16.msra.mxu0 %v2047
    %2553 = vmatprep.mubr.bf16.mxu0 %v92
    %2554 = vmatmul.mubr.bf16.gmra.mrb[0].mxu0 %v91
    %v2555 = vpop.f32.mrb[0].mxu0
    %v2556 = vadd.f32 %v2515, %v2555
    %v2557 = vpop.f32.mrb[0].mxu0
    %v2558 = vadd.f32 %v2517, %v2557
    %v2559 = vpop.f32.mrb[0].mxu0
    %v2560 = vpop.f32.mrb[0].mxu0
    %2561 = vdwg.mxu0
    %2562 = vmatprep.subr.bf16.mxu0 %v1674
    %2563 = vmatpush1.bf16.msra.mxu0 %v1673
    %2564 = vmatprep.subr.bf16.mxu0 %v1682
    %2565 = vmatpush1.bf16.msra.mxu0 %v1681
    %2566 = vmatprep.subr.bf16.mxu0 %v1690
    %2567 = vmatpush1.bf16.msra.mxu0 %v1689
    %2568 = vmatprep.subr.bf16.mxu0 %v1698
    %2569 = vmatpush1.bf16.msra.mxu0 %v1697
    %2570 = vmatprep.subr.bf16.mxu0 %v1706
    %2571 = vmatpush1.bf16.msra.mxu0 %v1705
    %2572 = vmatprep.subr.bf16.mxu0 %v1714
    %2573 = vmatpush1.bf16.msra.mxu0 %v1713
    %2574 = vmatprep.subr.bf16.mxu0 %v1722
    %2575 = vmatpush1.bf16.msra.mxu0 %v1721
    %2576 = vmatprep.subr.bf16.mxu0 %v1730
    %2577 = vmatpush1.bf16.msra.mxu0 %v1729
    %2578 = vmatprep.subr.bf16.mxu0 %v1738
    %2579 = vmatpush1.bf16.msra.mxu0 %v1737
    %2580 = vmatprep.subr.bf16.mxu0 %v1746
    %2581 = vmatpush1.bf16.msra.mxu0 %v1745
    %2582 = vmatprep.subr.bf16.mxu0 %v1754
    %2583 = vmatpush1.bf16.msra.mxu0 %v1753
    %2584 = vmatprep.subr.bf16.mxu0 %v1762
    %2585 = vmatpush1.bf16.msra.mxu0 %v1761
    %2586 = vmatprep.subr.bf16.mxu0 %v1770
    %2587 = vmatpush1.bf16.msra.mxu0 %v1769
    %2588 = vmatprep.subr.bf16.mxu0 %v1778
    %2589 = vmatpush1.bf16.msra.mxu0 %v1777
    %2590 = vmatprep.subr.bf16.mxu0 %v1786
    %2591 = vmatpush1.bf16.msra.mxu0 %v1785
    %2592 = vmatprep.subr.bf16.mxu0 %v1794
    %2593 = vmatpush1.bf16.msra.mxu0 %v1793
    %2594 = vmatprep.mubr.bf16.mxu0 %v88
    %2595 = vmatmul.mubr.bf16.gmra.mrb[0].mxu0 %v87
    %v2596 = vpop.f32.mrb[0].mxu0
    %v2597 = vadd.f32 %v490, %v2596
    %v2598 = vpop.f32.mrb[0].mxu0
    %v2599 = vadd.f32 %v494, %v2598
    %v2600 = vpop.f32.mrb[0].mxu0
    %v2601 = vpop.f32.mrb[0].mxu0
    %2602 = vdwg.mxu0
    %2603 = vmatprep.subr.bf16.mxu0 %v1802
    %2604 = vmatpush1.bf16.msra.mxu0 %v1801
    %2605 = vmatprep.subr.bf16.mxu0 %v1810
    %2606 = vmatpush1.bf16.msra.mxu0 %v1809
    %2607 = vmatprep.subr.bf16.mxu0 %v1818
    %2608 = vmatpush1.bf16.msra.mxu0 %v1817
    %2609 = vmatprep.subr.bf16.mxu0 %v1826
    %2610 = vmatpush1.bf16.msra.mxu0 %v1825
    %2611 = vmatprep.subr.bf16.mxu0 %v1834
    %2612 = vmatpush1.bf16.msra.mxu0 %v1833
    %2613 = vmatprep.subr.bf16.mxu0 %v1842
    %2614 = vmatpush1.bf16.msra.mxu0 %v1841
    %2615 = vmatprep.subr.bf16.mxu0 %v1850
    %2616 = vmatpush1.bf16.msra.mxu0 %v1849
    %2617 = vmatprep.subr.bf16.mxu0 %v1858
    %2618 = vmatpush1.bf16.msra.mxu0 %v1857
    %2619 = vmatprep.subr.bf16.mxu0 %v1866
    %2620 = vmatpush1.bf16.msra.mxu0 %v1865
    %2621 = vmatprep.subr.bf16.mxu0 %v1874
    %2622 = vmatpush1.bf16.msra.mxu0 %v1873
    %2623 = vmatprep.subr.bf16.mxu0 %v1882
    %2624 = vmatpush1.bf16.msra.mxu0 %v1881
    %2625 = vmatprep.subr.bf16.mxu0 %v1890
    %2626 = vmatpush1.bf16.msra.mxu0 %v1889
    %2627 = vmatprep.subr.bf16.mxu0 %v1898
    %2628 = vmatpush1.bf16.msra.mxu0 %v1897
    %2629 = vmatprep.subr.bf16.mxu0 %v1906
    %2630 = vmatpush1.bf16.msra.mxu0 %v1905
    %2631 = vmatprep.subr.bf16.mxu0 %v1914
    %2632 = vmatpush1.bf16.msra.mxu0 %v1913
    %2633 = vmatprep.subr.bf16.mxu0 %v1922
    %2634 = vmatpush1.bf16.msra.mxu0 %v1921
    %2635 = vmatprep.mubr.bf16.mxu0 %v90
    %2636 = vmatmul.mubr.bf16.gmra.mrb[0].mxu0 %v89
    %v2637 = vpop.f32.mrb[0].mxu0
    %v2638 = vadd.f32 %v2597, %v2637
    %v2639 = vpop.f32.mrb[0].mxu0
    %v2640 = vadd.f32 %v2599, %v2639
    %v2641 = vpop.f32.mrb[0].mxu0
    %v2642 = vpop.f32.mrb[0].mxu0
    %2643 = vdwg.mxu0
    %2644 = vmatprep.subr.bf16.mxu0 %v1930
    %2645 = vmatpush1.bf16.msra.mxu0 %v1929
    %2646 = vmatprep.subr.bf16.mxu0 %v1938
    %2647 = vmatpush1.bf16.msra.mxu0 %v1937
    %2648 = vmatprep.subr.bf16.mxu0 %v1946
    %2649 = vmatpush1.bf16.msra.mxu0 %v1945
    %2650 = vmatprep.subr.bf16.mxu0 %v1954
    %2651 = vmatpush1.bf16.msra.mxu0 %v1953
    %2652 = vmatprep.subr.bf16.mxu0 %v1962
    %2653 = vmatpush1.bf16.msra.mxu0 %v1961
    %2654 = vmatprep.subr.bf16.mxu0 %v1970
    %2655 = vmatpush1.bf16.msra.mxu0 %v1969
    %2656 = vmatprep.subr.bf16.mxu0 %v1978
    %2657 = vmatpush1.bf16.msra.mxu0 %v1977
    %2658 = vmatprep.subr.bf16.mxu0 %v1986
    %2659 = vmatpush1.bf16.msra.mxu0 %v1985
    %2660 = vmatprep.subr.bf16.mxu0 %v1994
    %2661 = vmatpush1.bf16.msra.mxu0 %v1993
    %2662 = vmatprep.subr.bf16.mxu0 %v2002
    %2663 = vmatpush1.bf16.msra.mxu0 %v2001
    %2664 = vmatprep.subr.bf16.mxu0 %v2010
    %2665 = vmatpush1.bf16.msra.mxu0 %v2009
    %2666 = vmatprep.subr.bf16.mxu0 %v2018
    %2667 = vmatpush1.bf16.msra.mxu0 %v2017
    %2668 = vmatprep.subr.bf16.mxu0 %v2026
    %2669 = vmatpush1.bf16.msra.mxu0 %v2025
    %2670 = vmatprep.subr.bf16.mxu0 %v2034
    %2671 = vmatpush1.bf16.msra.mxu0 %v2033
    %2672 = vmatprep.subr.bf16.mxu0 %v2042
    %2673 = vmatpush1.bf16.msra.mxu0 %v2041
    %2674 = vmatprep.subr.bf16.mxu0 %v2050
    %2675 = vmatpush1.bf16.msra.mxu0 %v2049
    %2676 = vmatprep.mubr.bf16.mxu0 %v92
    %2677 = vmatmul.mubr.bf16.gmra.mrb[0].mxu0 %v91
    %v2678 = vpop.f32.mrb[0].mxu0
    %v2679 = vadd.f32 %v2638, %v2678
    %v2680 = vpop.f32.mrb[0].mxu0
    %v2681 = vadd.f32 %v2640, %v2680
    %v2682 = vpop.f32.mrb[0].mxu0
    %v2683 = vpop.f32.mrb[0].mxu0
    %2684 = vdwg.mxu0
    %2685 = vmatprep.subr.bf16.mxu0 %v1676
    %2686 = vmatpush1.bf16.msra.mxu0 %v1675
    %2687 = vmatprep.subr.bf16.mxu0 %v1684
    %2688 = vmatpush1.bf16.msra.mxu0 %v1683
    %2689 = vmatprep.subr.bf16.mxu0 %v1692
    %2690 = vmatpush1.bf16.msra.mxu0 %v1691
    %2691 = vmatprep.subr.bf16.mxu0 %v1700
    %2692 = vmatpush1.bf16.msra.mxu0 %v1699
    %2693 = vmatprep.subr.bf16.mxu0 %v1708
    %2694 = vmatpush1.bf16.msra.mxu0 %v1707
    %2695 = vmatprep.subr.bf16.mxu0 %v1716
    %2696 = vmatpush1.bf16.msra.mxu0 %v1715
    %2697 = vmatprep.subr.bf16.mxu0 %v1724
    %2698 = vmatpush1.bf16.msra.mxu0 %v1723
    %2699 = vmatprep.subr.bf16.mxu0 %v1732
    %2700 = vmatpush1.bf16.msra.mxu0 %v1731
    %2701 = vmatprep.subr.bf16.mxu0 %v1740
    %2702 = vmatpush1.bf16.msra.mxu0 %v1739
    %2703 = vmatprep.subr.bf16.mxu0 %v1748
    %2704 = vmatpush1.bf16.msra.mxu0 %v1747
    %2705 = vmatprep.subr.bf16.mxu0 %v1756
    %2706 = vmatpush1.bf16.msra.mxu0 %v1755
    %2707 = vmatprep.subr.bf16.mxu0 %v1764
    %2708 = vmatpush1.bf16.msra.mxu0 %v1763
    %2709 = vmatprep.subr.bf16.mxu0 %v1772
    %2710 = vmatpush1.bf16.msra.mxu0 %v1771
    %2711 = vmatprep.subr.bf16.mxu0 %v1780
    %2712 = vmatpush1.bf16.msra.mxu0 %v1779
    %2713 = vmatprep.subr.bf16.mxu0 %v1788
    %2714 = vmatpush1.bf16.msra.mxu0 %v1787
    %2715 = vmatprep.subr.bf16.mxu0 %v1796
    %2716 = vmatpush1.bf16.msra.mxu0 %v1795
    %2717 = vmatprep.mubr.bf16.mxu0 %v88
    %2718 = vmatmul.mubr.bf16.gmra.mrb[0].mxu0 %v87
    %v2719 = vpop.f32.mrb[0].mxu0
    %v2720 = vadd.f32 %v498, %v2719
    %v2721 = vpop.f32.mrb[0].mxu0
    %v2722 = vadd.f32 %v502, %v2721
    %v2723 = vpop.f32.mrb[0].mxu0
    %v2724 = vpop.f32.mrb[0].mxu0
    %2725 = vdwg.mxu0
    %2726 = vmatprep.subr.bf16.mxu0 %v1804
    %2727 = vmatpush1.bf16.msra.mxu0 %v1803
    %2728 = vmatprep.subr.bf16.mxu0 %v1812
    %2729 = vmatpush1.bf16.msra.mxu0 %v1811
    %2730 = vmatprep.subr.bf16.mxu0 %v1820
    %2731 = vmatpush1.bf16.msra.mxu0 %v1819
    %2732 = vmatprep.subr.bf16.mxu0 %v1828
    %2733 = vmatpush1.bf16.msra.mxu0 %v1827
    %2734 = vmatprep.subr.bf16.mxu0 %v1836
    %2735 = vmatpush1.bf16.msra.mxu0 %v1835
    %2736 = vmatprep.subr.bf16.mxu0 %v1844
    %2737 = vmatpush1.bf16.msra.mxu0 %v1843
    %2738 = vmatprep.subr.bf16.mxu0 %v1852
    %2739 = vmatpush1.bf16.msra.mxu0 %v1851
    %2740 = vmatprep.subr.bf16.mxu0 %v1860
    %2741 = vmatpush1.bf16.msra.mxu0 %v1859
    %2742 = vmatprep.subr.bf16.mxu0 %v1868
    %2743 = vmatpush1.bf16.msra.mxu0 %v1867
    %2744 = vmatprep.subr.bf16.mxu0 %v1876
    %2745 = vmatpush1.bf16.msra.mxu0 %v1875
    %2746 = vmatprep.subr.bf16.mxu0 %v1884
    %2747 = vmatpush1.bf16.msra.mxu0 %v1883
    %2748 = vmatprep.subr.bf16.mxu0 %v1892
    %2749 = vmatpush1.bf16.msra.mxu0 %v1891
    %2750 = vmatprep.subr.bf16.mxu0 %v1900
    %2751 = vmatpush1.bf16.msra.mxu0 %v1899
    %2752 = vmatprep.subr.bf16.mxu0 %v1908
    %2753 = vmatpush1.bf16.msra.mxu0 %v1907
    %2754 = vmatprep.subr.bf16.mxu0 %v1916
    %2755 = vmatpush1.bf16.msra.mxu0 %v1915
    %2756 = vmatprep.subr.bf16.mxu0 %v1924
    %2757 = vmatpush1.bf16.msra.mxu0 %v1923
    %2758 = vmatprep.mubr.bf16.mxu0 %v90
    %2759 = vmatmul.mubr.bf16.gmra.mrb[0].mxu0 %v89
    %v2760 = vpop.f32.mrb[0].mxu0
    %v2761 = vadd.f32 %v2720, %v2760
    %v2762 = vpop.f32.mrb[0].mxu0
    %v2763 = vadd.f32 %v2722, %v2762
    %v2764 = vpop.f32.mrb[0].mxu0
    %v2765 = vpop.f32.mrb[0].mxu0
    %2766 = vdwg.mxu0
    %2767 = vmatprep.subr.bf16.mxu0 %v1932
    %2768 = vmatpush1.bf16.msra.mxu0 %v1931
    %2769 = vmatprep.subr.bf16.mxu0 %v1940
    %2770 = vmatpush1.bf16.msra.mxu0 %v1939
    %2771 = vmatprep.subr.bf16.mxu0 %v1948
    %2772 = vmatpush1.bf16.msra.mxu0 %v1947
    %2773 = vmatprep.subr.bf16.mxu0 %v1956
    %2774 = vmatpush1.bf16.msra.mxu0 %v1955
    %2775 = vmatprep.subr.bf16.mxu0 %v1964
    %2776 = vmatpush1.bf16.msra.mxu0 %v1963
    %2777 = vmatprep.subr.bf16.mxu0 %v1972
    %2778 = vmatpush1.bf16.msra.mxu0 %v1971
    %2779 = vmatprep.subr.bf16.mxu0 %v1980
    %2780 = vmatpush1.bf16.msra.mxu0 %v1979
    %2781 = vmatprep.subr.bf16.mxu0 %v1988
    %2782 = vmatpush1.bf16.msra.mxu0 %v1987
    %2783 = vmatprep.subr.bf16.mxu0 %v1996
    %2784 = vmatpush1.bf16.msra.mxu0 %v1995
    %2785 = vmatprep.subr.bf16.mxu0 %v2004
    %2786 = vmatpush1.bf16.msra.mxu0 %v2003
    %2787 = vmatprep.subr.bf16.mxu0 %v2012
    %2788 = vmatpush1.bf16.msra.mxu0 %v2011
    %2789 = vmatprep.subr.bf16.mxu0 %v2020
    %2790 = vmatpush1.bf16.msra.mxu0 %v2019
    %2791 = vmatprep.subr.bf16.mxu0 %v2028
    %2792 = vmatpush1.bf16.msra.mxu0 %v2027
    %2793 = vmatprep.subr.bf16.mxu0 %v2036
    %2794 = vmatpush1.bf16.msra.mxu0 %v2035
    %2795 = vmatprep.subr.bf16.mxu0 %v2044
    %2796 = vmatpush1.bf16.msra.mxu0 %v2043
    %2797 = vmatprep.subr.bf16.mxu0 %v2052
    %2798 = vmatpush1.bf16.msra.mxu0 %v2051
    %2799 = vmatprep.mubr.bf16.mxu0 %v92
    %2800 = vmatmul.mubr.bf16.gmra.mrb[0].mxu0 %v91
    %v2801 = vpop.f32.mrb[0].mxu0
    %v2802 = vadd.f32 %v2761, %v2801
    %v2803 = vpop.f32.mrb[0].mxu0
    %v2804 = vadd.f32 %v2763, %v2803
    %v2805 = vpop.f32.mrb[0].mxu0
    %v2806 = vpop.f32.mrb[0].mxu0
    %2807 = vdwg.mxu0
    %2808 = vmatprep.subr.bf16.mxu0 %v1678
    %2809 = vmatpush1.bf16.msra.mxu0 %v1677
    %2810 = vmatprep.subr.bf16.mxu0 %v1686
    %2811 = vmatpush1.bf16.msra.mxu0 %v1685
    %2812 = vmatprep.subr.bf16.mxu0 %v1694
    %2813 = vmatpush1.bf16.msra.mxu0 %v1693
    %2814 = vmatprep.subr.bf16.mxu0 %v1702
    %2815 = vmatpush1.bf16.msra.mxu0 %v1701
    %2816 = vmatprep.subr.bf16.mxu0 %v1710
    %2817 = vmatpush1.bf16.msra.mxu0 %v1709
    %2818 = vmatprep.subr.bf16.mxu0 %v1718
    %2819 = vmatpush1.bf16.msra.mxu0 %v1717
    %2820 = vmatprep.subr.bf16.mxu0 %v1726
    %2821 = vmatpush1.bf16.msra.mxu0 %v1725
    %2822 = vmatprep.subr.bf16.mxu0 %v1734
    %2823 = vmatpush1.bf16.msra.mxu0 %v1733
    %2824 = vmatprep.subr.bf16.mxu0 %v1742
    %2825 = vmatpush1.bf16.msra.mxu0 %v1741
    %2826 = vmatprep.subr.bf16.mxu0 %v1750
    %2827 = vmatpush1.bf16.msra.mxu0 %v1749
    %2828 = vmatprep.subr.bf16.mxu0 %v1758
    %2829 = vmatpush1.bf16.msra.mxu0 %v1757
    %2830 = vmatprep.subr.bf16.mxu0 %v1766
    %2831 = vmatpush1.bf16.msra.mxu0 %v1765
    %2832 = vmatprep.subr.bf16.mxu0 %v1774
    %2833 = vmatpush1.bf16.msra.mxu0 %v1773
    %2834 = vmatprep.subr.bf16.mxu0 %v1782
    %2835 = vmatpush1.bf16.msra.mxu0 %v1781
    %2836 = vmatprep.subr.bf16.mxu0 %v1790
    %2837 = vmatpush1.bf16.msra.mxu0 %v1789
    %2838 = vmatprep.subr.bf16.mxu0 %v1798
    %2839 = vmatpush1.bf16.msra.mxu0 %v1797
    %2840 = vmatprep.mubr.bf16.mxu0 %v88
    %2841 = vmatmul.mubr.bf16.gmra.mrb[0].mxu0 %v87
    %v2842 = vpop.f32.mrb[0].mxu0
    %v2843 = vadd.f32 %v506, %v2842
    %v2844 = vpop.f32.mrb[0].mxu0
    %v2845 = vadd.f32 %v510, %v2844
    %v2846 = vpop.f32.mrb[0].mxu0
    %v2847 = vpop.f32.mrb[0].mxu0
    %2848 = vdwg.mxu0
    %2849 = vmatprep.subr.bf16.mxu0 %v1806
    %2850 = vmatpush1.bf16.msra.mxu0 %v1805
    %2851 = vmatprep.subr.bf16.mxu0 %v1814
    %2852 = vmatpush1.bf16.msra.mxu0 %v1813
    %2853 = vmatprep.subr.bf16.mxu0 %v1822
    %2854 = vmatpush1.bf16.msra.mxu0 %v1821
    %2855 = vmatprep.subr.bf16.mxu0 %v1830
    %2856 = vmatpush1.bf16.msra.mxu0 %v1829
    %2857 = vmatprep.subr.bf16.mxu0 %v1838
    %2858 = vmatpush1.bf16.msra.mxu0 %v1837
    %2859 = vmatprep.subr.bf16.mxu0 %v1846
    %2860 = vmatpush1.bf16.msra.mxu0 %v1845
    %2861 = vmatprep.subr.bf16.mxu0 %v1854
    %2862 = vmatpush1.bf16.msra.mxu0 %v1853
    %2863 = vmatprep.subr.bf16.mxu0 %v1862
    %2864 = vmatpush1.bf16.msra.mxu0 %v1861
    %2865 = vmatprep.subr.bf16.mxu0 %v1870
    %2866 = vmatpush1.bf16.msra.mxu0 %v1869
    %2867 = vmatprep.subr.bf16.mxu0 %v1878
    %2868 = vmatpush1.bf16.msra.mxu0 %v1877
    %2869 = vmatprep.subr.bf16.mxu0 %v1886
    %2870 = vmatpush1.bf16.msra.mxu0 %v1885
    %2871 = vmatprep.subr.bf16.mxu0 %v1894
    %2872 = vmatpush1.bf16.msra.mxu0 %v1893
    %2873 = vmatprep.subr.bf16.mxu0 %v1902
    %2874 = vmatpush1.bf16.msra.mxu0 %v1901
    %2875 = vmatprep.subr.bf16.mxu0 %v1910
    %2876 = vmatpush1.bf16.msra.mxu0 %v1909
    %2877 = vmatprep.subr.bf16.mxu0 %v1918
    %2878 = vmatpush1.bf16.msra.mxu0 %v1917
    %2879 = vmatprep.subr.bf16.mxu0 %v1926
    %2880 = vmatpush1.bf16.msra.mxu0 %v1925
    %2881 = vmatprep.mubr.bf16.mxu0 %v90
    %2882 = vmatmul.mubr.bf16.gmra.mrb[0].mxu0 %v89
    %v2883 = vpop.f32.mrb[0].mxu0
    %v2884 = vadd.f32 %v2843, %v2883
    %v2885 = vpop.f32.mrb[0].mxu0
    %v2886 = vadd.f32 %v2845, %v2885
    %v2887 = vpop.f32.mrb[0].mxu0
    %v2888 = vpop.f32.mrb[0].mxu0
    %2889 = vdwg.mxu0
    %2890 = vmatprep.subr.bf16.mxu0 %v1934
    %2891 = vmatpush1.bf16.msra.mxu0 %v1933
    %2892 = vmatprep.subr.bf16.mxu0 %v1942
    %2893 = vmatpush1.bf16.msra.mxu0 %v1941
    %2894 = vmatprep.subr.bf16.mxu0 %v1950
    %2895 = vmatpush1.bf16.msra.mxu0 %v1949
    %2896 = vmatprep.subr.bf16.mxu0 %v1958
    %2897 = vmatpush1.bf16.msra.mxu0 %v1957
    %2898 = vmatprep.subr.bf16.mxu0 %v1966
    %2899 = vmatpush1.bf16.msra.mxu0 %v1965
    %2900 = vmatprep.subr.bf16.mxu0 %v1974
    %2901 = vmatpush1.bf16.msra.mxu0 %v1973
    %2902 = vmatprep.subr.bf16.mxu0 %v1982
    %2903 = vmatpush1.bf16.msra.mxu0 %v1981
    %2904 = vmatprep.subr.bf16.mxu0 %v1990
    %2905 = vmatpush1.bf16.msra.mxu0 %v1989
    %2906 = vmatprep.subr.bf16.mxu0 %v1998
    %2907 = vmatpush1.bf16.msra.mxu0 %v1997
    %2908 = vmatprep.subr.bf16.mxu0 %v2006
    %2909 = vmatpush1.bf16.msra.mxu0 %v2005
    %2910 = vmatprep.subr.bf16.mxu0 %v2014
    %2911 = vmatpush1.bf16.msra.mxu0 %v2013
    %2912 = vmatprep.subr.bf16.mxu0 %v2022
    %2913 = vmatpush1.bf16.msra.mxu0 %v2021
    %2914 = vmatprep.subr.bf16.mxu0 %v2030
    %2915 = vmatpush1.bf16.msra.mxu0 %v2029
    %2916 = vmatprep.subr.bf16.mxu0 %v2038
    %2917 = vmatpush1.bf16.msra.mxu0 %v2037
    %2918 = vmatprep.subr.bf16.mxu0 %v2046
    %2919 = vmatpush1.bf16.msra.mxu0 %v2045
    %2920 = vmatprep.subr.bf16.mxu0 %v2054
    %2921 = vmatpush1.bf16.msra.mxu0 %v2053
    %2922 = vmatprep.mubr.bf16.mxu0 %v92
    %2923 = vmatmul.mubr.bf16.gmra.mrb[0].mxu0 %v91
    %v2924 = vpop.f32.mrb[0].mxu0
    %v2925 = vadd.f32 %v2884, %v2924
    %v2926 = vpop.f32.mrb[0].mxu0
    %v2927 = vadd.f32 %v2886, %v2926
    %v2928 = vpop.f32.mrb[0].mxu0
    %v2929 = vpop.f32.mrb[0].mxu0
    %2930 = vdwg.mxu0
    %v2939 = vcombine.low %v2556, %v2558
    %v2940 = vcombine.low %v2679, %v2681
    %v2942 = vunpack.c.l.s4 1983009808
    %v2943 = vunpack.c.0.s8 %v2942
    %v2944 = vlaneseq
    %v2945 = vshrl.u32 %v2944, 7
    %v2946 = vsub.s32 %v2943, %v2945
    %v2947 = vrot.slane %v2939, %v2946
    %v2949 = vunpack.c.l.s4 1983009808
    %v2950 = vunpack.c.0.s8 %v2949
    %v2951 = vlaneseq
    %v2952 = vshrl.u32 %v2951, 7
    %v2953 = vsub.s32 %v2950, %v2952
    %v2954 = vrot.slane %v2940, %v2953
    %v2955 = vcombine.low %v2947, %v2954
    %v2956 = vcombine.low %v2802, %v2804
    %v2957 = vcombine.low %v2925, %v2927
    %v2959 = vunpack.c.l.s4 1983009808
    %v2960 = vunpack.c.0.s8 %v2959
    %v2961 = vlaneseq
    %v2962 = vshrl.u32 %v2961, 7
    %v2963 = vsub.s32 %v2960, %v2962
    %v2964 = vrot.slane %v2956, %v2963
    %v2966 = vunpack.c.l.s4 1983009808
    %v2967 = vunpack.c.0.s8 %v2966
    %v2968 = vlaneseq
    %v2969 = vshrl.u32 %v2968, 7
    %v2970 = vsub.s32 %v2967, %v2969
    %v2971 = vrot.slane %v2957, %v2970
    %v2972 = vcombine.low %v2964, %v2971
    %2975 = vst [vmem:[#allocation8] sm:$0xff] %v2955
    %2976 = vst [vmem:[#allocation8 + $0x8] sm:$0xff] %v2972
    // Predicated region
    $region26: #{vit_b16_tail.1} parent=1 // pred_check
      _
    $region27: #{vit_b16_tail.1} parent=1 // pred_check_branch
      %2978 = sbr.rel (0) target = $region29
    $region28: #{vit_b16_tail.1} parent=1 // pred_region
      %s2980 = ssub.s32 256, 256
      %2981 = vsyncadd [#allocation4], %s2980
      %s2983 = sshll.u32 [#allocation8], 4
      %s2984 = int_to_ptr.vmem [resolvable:$true] %s2983
      %2986 = dma.vmem_to_hbm [thread:$0]  %s2984, 256, %s3, [#allocation4]
    $region29: #{vit_b16_tail.1} parent=1 // pred_fallthru
      _
    // Predicated region
    $region30: #{vit_b16_tail.1} parent=1 // pred_check
      _
    $region31: #{vit_b16_tail.1} parent=1 // pred_check_branch
      %2988 = sbr.rel (0) target = $region33
    $region32: #{vit_b16_tail.1} parent=1 // pred_region
      %2989 = dma.done [#allocation4], 256
    $region33: #{vit_b16_tail.1} parent=1 // pred_fallthru
      _
    %2990 = vsyncpa [#allocation3], 1
    %2991 = vsyncpa [#allocation6], 1
    %2992 = vsyncpa [#allocation4], 1

</llo_original>
